<compile_context>
chip_gen: v7x
topology: tpu7x:2x2x1
jax: 0.10.0
libtpu: 0.0.40
codegen_flags: <defaults>
</compile_context>

<pallas_src>
import jax
import jax.numpy as jnp
from jax.experimental import pallas as pl
from jax.experimental.pallas import tpu as pltpu


def _sigmoid(v):
    # exp -> EUP, reciprocal-style divide; exact enough vs jax.nn.sigmoid.
    return 1.0 / (1.0 + jnp.exp(-v))


# ----------------------------------------------------------------------------
# Kernel 1: channel attention vector + channel-wise avg/max stat map
#   x block      : (1, C, HW)   -- whole spatial extent of one batch in VMEM
#   w1t, w2      : (C, Cr)      -- squeeze-excite weights (tiny)
#   att output   : (1, C, 1)    -- sigmoid(MLP(avg-pool(x)))
#   stats output : (1, 2, HW)   -- [mean_c(x*att), max_c(x*att)]
# ----------------------------------------------------------------------------
def _ca_stats_kernel(x_ref, w1t_ref, w2_ref, att_ref, stats_ref):
    x = x_ref[0]                                            # (C, HW) f32
    c = x.shape[0]
    hw = x.shape[1]

    # AdaptiveAvgPool2d(1): mean over the spatial (lane) axis.
    pooled = jnp.sum(x, axis=1, keepdims=True) * (1.0 / hw)          # (C, 1)

    # Squeeze-excite MLP (Conv 1x1 -> ReLU -> Conv 1x1 -> Sigmoid), done with
    # broadcast + reductions (tiny; avoids degenerate M=1/N=1 MXU matmuls and
    # keeps exact f32).  w1t[c, r] = W1[r, c], w2[c, r] = W2[c, r].
    h = jnp.sum(w1t_ref[...] * pooled, axis=0, keepdims=True)        # (1, Cr)
    h = jnp.maximum(h, 0.0)
    att = _sigmoid(jnp.sum(w2_ref[...] * h, axis=1, keepdims=True))  # (C, 1)
    att_ref[0] = att

    # Channel-attended activation stays in VMEM only; emit just the stats
    # the 7x7 spatial-attention conv needs.
    y = x * att                                                      # (C, HW)
    stats_ref[0, 0:1, :] = jnp.sum(y, axis=0, keepdims=True) * (1.0 / c)
    stats_ref[0, 1:2, :] = jnp.max(y, axis=0, keepdims=True)


def channel_attention_stats(x3, w1t, w2m, *, vmem_limit_bytes):
    B, C, HW = x3.shape
    Cr = w1t.shape[1]
    return pl.pallas_call(
        _ca_stats_kernel,
        out_shape=(
            jax.ShapeDtypeStruct((B, C, 1), jnp.float32),
            jax.ShapeDtypeStruct((B, 2, HW), jnp.float32),
        ),
        grid=(B,),
        in_specs=[
            pl.BlockSpec((1, C, HW), lambda b: (b, 0, 0)),
            pl.BlockSpec((C, Cr), lambda b: (0, 0)),
            pl.BlockSpec((C, Cr), lambda b: (0, 0)),
        ],
        out_specs=(
            pl.BlockSpec((1, C, 1), lambda b: (b, 0, 0)),
            pl.BlockSpec((1, 2, HW), lambda b: (b, 0, 0)),
        ),
        compiler_params=pltpu.CompilerParams(
            dimension_semantics=("parallel",),
            vmem_limit_bytes=vmem_limit_bytes),
    )(x3, w1t, w2m)


# ----------------------------------------------------------------------------
# Kernel 2: fused gating  out = x * att * sa  (HW tiled, lane-dense blocks)
# ----------------------------------------------------------------------------
def _gate_kernel(x_ref, att_ref, sa_ref, o_ref):
    # x: (C, T), att: (C, 1) broadcast over lanes, sa: (1, T) broadcast over
    # sublanes -- pure VPU, lane-dense stores.
    o_ref[0] = x_ref[0] * att_ref[0] * sa_ref[0]


def gate_apply(x3, att, sa, hw_tile, *, vmem_limit_bytes):
    B, C, HW = x3.shape
    nt = HW // hw_tile
    return pl.pallas_call(
        _gate_kernel,
        out_shape=jax.ShapeDtypeStruct((B, C, HW), jnp.float32),
        grid=(B, nt),
        in_specs=[
            pl.BlockSpec((1, C, hw_tile), lambda b, t: (b, 0, t)),
            pl.BlockSpec((1, C, 1), lambda b, t: (b, 0, 0)),
            pl.BlockSpec((1, 1, hw_tile), lambda b, t: (b, 0, t)),
        ],
        out_specs=pl.BlockSpec((1, C, hw_tile), lambda b, t: (b, 0, t)),
        compiler_params=pltpu.CompilerParams(
            dimension_semantics=("parallel", "parallel"),
            vmem_limit_bytes=vmem_limit_bytes),
    )(x3, att, sa)


# ----------------------------------------------------------------------------
# HW tile picker: largest multiple-of-128 divisor of HW under a VMEM budget,
# preferring >1 tile per batch so the pipeline / megacore have depth.
# ----------------------------------------------------------------------------
def _pick_hw_tile(hw, c, budget_bytes=8 * 1024 * 1024):
    if hw % 128 != 0:
        return hw                       # block == full dim, always legal
    cands = [t for t in range(128, hw + 1, 128)
             if hw % t == 0 and 4 * c * t * 4 <= budget_bytes]
    if not cands:
        return 128
    sub_full = [t for t in cands if t < hw]
    return max(sub_full) if sub_full else hw


# ----------------------------------------------------------------------------
# CBAM forward (NCHW in / NCHW out, like the PyTorch module)
# ----------------------------------------------------------------------------
def cbam_forward(x_nchw, params):
    B, C, H, W = x_nchw.shape
    HW = H * W
    x3 = x_nchw.reshape(B, C, HW)             # free reshape, no transpose

    w1 = params["ca_w1"]                      # (Cr, C, 1, 1)
    w2 = params["ca_w2"]                      # (C, Cr, 1, 1)
    Cr = w1.shape[0]
    w1t = w1.reshape(Cr, C).T                 # (C, Cr)
    w2m = w2.reshape(C, Cr)                   # (C, Cr)

    # TODO(synk): for very large C*HW (> ~VMEM/3) kernel 1 needs an HW-tiled
    # two-pass variant; fine for typical CBAM feature-map sizes.
    k1_block = C * HW * 4
    k1_vmem = int(max(32 * 1024 * 1024, min(48 * 1024 * 1024, 3 * k1_block)))

    att, stats = channel_attention_stats(x3, w1t, w2m, vmem_limit_bytes=k1_vmem)

    # 7x7 spatial-attention conv + sigmoid on the tiny (B, 2, H, W) stat map.
    hi = jax.lax.Precision.HIGHEST
    sa = jax.lax.conv_general_dilated(
        stats.reshape(B, 2, H, W), params["sa_w"], window_strides=(1, 1),
        padding="SAME", dimension_numbers=("NCHW", "OIHW", "NCHW"),
        precision=hi)
    sa = _sigmoid(sa).reshape(B, 1, HW)

    hw_tile = _pick_hw_tile(HW, C)
    out3 = gate_apply(x3, att, sa, hw_tile,
                      vmem_limit_bytes=32 * 1024 * 1024)
    return out3.reshape(B, C, H, W)


# ----------------------------------------------------------------------------
# Pure-JAX reference (mirrors the PyTorch CBAM forward) for validation
# ----------------------------------------------------------------------------
def cbam_reference(x, params):
    B, C, H, W = x.shape
    Cr = params["ca_w1"].shape[0]
    w1 = params["ca_w1"].reshape(Cr, C)
    w2 = params["ca_w2"].reshape(C, Cr)
    hi = jax.lax.Precision.HIGHEST

    pooled = jnp.mean(x, axis=(2, 3))                                  # (B, C)
    h = jnp.maximum(jnp.matmul(pooled, w1.T, precision=hi), 0.0)       # (B, Cr)
    att = jax.nn.sigmoid(jnp.matmul(h, w2.T, precision=hi))            # (B, C)
    y = x * att[:, :, None, None]

    avg = jnp.mean(y, axis=1, keepdims=True)
    mx = jnp.max(y, axis=1, keepdims=True)
    cat = jnp.concatenate([avg, mx], axis=1)                           # (B, 2, H, W)
    sa = jax.lax.conv_general_dilated(
        cat, params["sa_w"], window_strides=(1, 1), padding="SAME",
        dimension_numbers=("NCHW", "OIHW", "NCHW"), precision=hi)
    sa = jax.nn.sigmoid(sa)
    return y * sa


# ----------------------------------------------------------------------------
# Deterministic synthetic parameters (shapes from the nn.Module __init__)
# ----------------------------------------------------------------------------
def init_params(key, channels, reduction=16, sa_kernel=7):
    cr = channels // reduction
    k1, k2, k3 = jax.random.split(key, 3)
    return {
        "ca_w1": jax.random.normal(k1, (cr, channels, 1, 1), jnp.float32)
        / jnp.sqrt(channels),
        "ca_w2": jax.random.normal(k2, (channels, cr, 1, 1), jnp.float32)
        / jnp.sqrt(max(cr, 1)),
        "sa_w": jax.random.normal(k3, (1, 2, sa_kernel, sa_kernel), jnp.float32)
        / jnp.sqrt(2.0 * sa_kernel * sa_kernel),
    }


if __name__ == "__main__":
    key = jax.random.PRNGKey(0)
    kp, kx = jax.random.split(key)

    # Small CBAM: batch=2, channels=128 (reduction 16 -> 8 hidden), 16x16 map.
    B, C, H, W = 2, 128, 16, 16
    params = init_params(kp, C)
    x = jax.random.normal(kx, (B, C, H, W), jnp.float32)

    out = jax.jit(cbam_forward)(x, params)
    out = jax.block_until_ready(out)
    assert out.shape == (B, C, H, W), out.shape
    assert out.dtype == jnp.float32

    ref = cbam_reference(x, params)
    err = float(jnp.max(jnp.abs(out - ref)))
    assert err < 1e-3, f"max abs err vs reference: {err}"
    print("KERNEL_OK")
</pallas_src>

<mosaic_0001>
module attributes {stable_mosaic.version = 11 : i64} {
  func.func @_ca_stats_kernel(%arg0: i32, %arg1: memref<1x128x256xf32, #tpu.memory_space<vmem>>, %arg2: memref<128x8xf32, #tpu.memory_space<vmem>>, %arg3: memref<128x8xf32, #tpu.memory_space<vmem>>, %arg4: memref<1x128x1xf32, #tpu.memory_space<vmem>>, %arg5: memref<1x2x256xf32, #tpu.memory_space<vmem>>) attributes {dimension_semantics = [#tpu.dimension_semantics<parallel>], iteration_bounds = array<i64: 2>, scalar_prefetch = 0 : i64, scratch_operands = 0 : i64, tpu.core_type = #tpu.core_type<tc>, window_params = [{transform_indices = @transform_0, window_bounds = array<i64: 1, 128, 256>}, {pipeline_mode = #tpu.pipeline_mode<synchronous>, transform_indices = @transform_1, window_bounds = array<i64: 128, 8>}, {pipeline_mode = #tpu.pipeline_mode<synchronous>, transform_indices = @transform_2, window_bounds = array<i64: 128, 8>}, {transform_indices = @transform_3, window_bounds = array<i64: 1, 128, 1>}, {transform_indices = @transform_4, window_bounds = array<i64: 1, 2, 256>}]} {
    %c0 = arith.constant 0 : index
    %c0_0 = arith.constant 0 : index
    %c0_1 = arith.constant 0 : index
    %0 = vector.load %arg1[%c0, %c0_0, %c0_1] : memref<1x128x256xf32, #tpu.memory_space<vmem>>, vector<1x128x256xf32>
    %1 = vector.shape_cast %0 : vector<1x128x256xf32> to vector<128x256xf32>
    %cst = arith.constant dense<0.000000e+00> : vector<128xf32>
    %2 = vector.multi_reduction <add>, %1, %cst [1] : vector<128x256xf32> to vector<128xf32>
    %3 = vector.shape_cast %2 : vector<128xf32> to vector<128x1xf32>
    %cst_2 = arith.constant 3.906250e-03 : f32
    %4 = vector.broadcast %cst_2 : f32 to vector<128x1xf32>
    %5 = arith.mulf %3, %4 : vector<128x1xf32>
    %c0_3 = arith.constant 0 : index
    %c0_4 = arith.constant 0 : index
    %6 = vector.load %arg2[%c0_3, %c0_4] : memref<128x8xf32, #tpu.memory_space<vmem>>, vector<128x8xf32>
    %7 = vector.broadcast %5 : vector<128x1xf32> to vector<128x8xf32>
    %8 = arith.mulf %6, %7 : vector<128x8xf32>
    %cst_5 = arith.constant dense<0.000000e+00> : vector<8xf32>
    %9 = vector.multi_reduction <add>, %8, %cst_5 [0] : vector<128x8xf32> to vector<8xf32>
    %10 = vector.shape_cast %9 : vector<8xf32> to vector<1x8xf32>
    %cst_6 = arith.constant 0.000000e+00 : f32
    %11 = vector.broadcast %cst_6 : f32 to vector<1x8xf32>
    %12 = arith.maximumf %10, %11 : vector<1x8xf32>
    %c0_7 = arith.constant 0 : index
    %c0_8 = arith.constant 0 : index
    %13 = vector.load %arg3[%c0_7, %c0_8] : memref<128x8xf32, #tpu.memory_space<vmem>>, vector<128x8xf32>
    %14 = vector.broadcast %12 : vector<1x8xf32> to vector<128x8xf32>
    %15 = arith.mulf %13, %14 : vector<128x8xf32>
    %cst_9 = arith.constant dense<0.000000e+00> : vector<128xf32>
    %16 = vector.multi_reduction <add>, %15, %cst_9 [1] : vector<128x8xf32> to vector<128xf32>
    %17 = vector.shape_cast %16 : vector<128xf32> to vector<128x1xf32>
    %cst_10 = arith.constant 0.000000e+00 : f32
    %18 = vector.broadcast %cst_10 : f32 to vector<128x1xf32>
    %19 = arith.subf %18, %17 : vector<128x1xf32>
    %20 = math.exp %19 : vector<128x1xf32>
    %cst_11 = arith.constant 1.000000e+00 : f32
    %21 = vector.broadcast %cst_11 : f32 to vector<128x1xf32>
    %22 = arith.addf %21, %20 : vector<128x1xf32>
    %cst_12 = arith.constant 1.000000e+00 : f32
    %23 = vector.broadcast %cst_12 : f32 to vector<128x1xf32>
    %24 = arith.divf %23, %22 : vector<128x1xf32>
    %c0_13 = arith.constant 0 : index
    %c0_14 = arith.constant 0 : index
    %c0_15 = arith.constant 0 : index
    %25 = vector.load %arg4[%c0_13, %c0_14, %c0_15] : memref<1x128x1xf32, #tpu.memory_space<vmem>>, vector<1x128x1xf32>
    %26 = vector.shape_cast %25 : vector<1x128x1xf32> to vector<128x1xf32>
    %27 = vector.shape_cast %24 : vector<128x1xf32> to vector<1x128x1xf32>
    tpu.vector_store %arg4[%c0_13, %c0_14, %c0_15], %27 {strides = array<i32>} : memref<1x128x1xf32, #tpu.memory_space<vmem>>, vector<1x128x1xf32>,
    %28 = vector.broadcast %24 : vector<128x1xf32> to vector<128x256xf32>
    %29 = arith.mulf %1, %28 : vector<128x256xf32>
    %cst_16 = arith.constant dense<0.000000e+00> : vector<256xf32>
    %30 = vector.multi_reduction <add>, %29, %cst_16 [0] : vector<128x256xf32> to vector<256xf32>
    %31 = vector.shape_cast %30 : vector<256xf32> to vector<1x256xf32>
    %cst_17 = arith.constant 7.812500e-03 : f32
    %32 = vector.broadcast %cst_17 : f32 to vector<1x256xf32>
    %33 = arith.mulf %31, %32 : vector<1x256xf32>
    %c0_18 = arith.constant 0 : index
    %c0_19 = arith.constant 0 : index
    %c0_20 = arith.constant 0 : index
    %34 = vector.load %arg5[%c0_18, %c0_19, %c0_20] : memref<1x2x256xf32, #tpu.memory_space<vmem>>, vector<1x1x256xf32>
    %35 = vector.shape_cast %34 : vector<1x1x256xf32> to vector<1x256xf32>
    %36 = vector.shape_cast %33 : vector<1x256xf32> to vector<1x1x256xf32>
    tpu.vector_store %arg5[%c0_18, %c0_19, %c0_20], %36 {strides = array<i32>} : memref<1x2x256xf32, #tpu.memory_space<vmem>>, vector<1x1x256xf32>,
    %cst_21 = arith.constant dense<0xFF800000> : vector<256xf32>
    %37 = vector.multi_reduction <maximumf>, %29, %cst_21 [0] : vector<128x256xf32> to vector<256xf32>
    %38 = vector.shape_cast %37 : vector<256xf32> to vector<1x256xf32>
    %c0_22 = arith.constant 0 : index
    %c1 = arith.constant 1 : index
    %c0_23 = arith.constant 0 : index
    %39 = vector.load %arg5[%c0_22, %c1, %c0_23] : memref<1x2x256xf32, #tpu.memory_space<vmem>>, vector<1x1x256xf32>
    %40 = vector.shape_cast %39 : vector<1x1x256xf32> to vector<1x256xf32>
    %41 = vector.shape_cast %38 : vector<1x256xf32> to vector<1x1x256xf32>
    tpu.vector_store %arg5[%c0_22, %c1, %c0_23], %41 {strides = array<i32>} : memref<1x2x256xf32, #tpu.memory_space<vmem>>, vector<1x1x256xf32>,
    return
  }
  func.func @transform_0(%arg0: i32) -> (i32, i32, i32) {
    %c0_i32 = arith.constant 0 : i32
    %c0_i32_0 = arith.constant 0 : i32
    %c0_i32_1 = arith.constant 0 : i32
    return %arg0, %c0_i32, %c0_i32_0 : i32, i32, i32
  }
  func.func @transform_1(%arg0: i32) -> (i32, i32) {
    %c0_i32 = arith.constant 0 : i32
    %c0_i32_0 = arith.constant 0 : i32
    %c0_i32_1 = arith.constant 0 : i32
    return %c0_i32, %c0_i32_0 : i32, i32
  }
  func.func @transform_2(%arg0: i32) -> (i32, i32) {
    %c0_i32 = arith.constant 0 : i32
    %c0_i32_0 = arith.constant 0 : i32
    %c0_i32_1 = arith.constant 0 : i32
    return %c0_i32, %c0_i32_0 : i32, i32
  }
  func.func @transform_3(%arg0: i32) -> (i32, i32, i32) {
    %c0_i32 = arith.constant 0 : i32
    %c0_i32_0 = arith.constant 0 : i32
    %c0_i32_1 = arith.constant 0 : i32
    return %arg0, %c0_i32, %c0_i32_0 : i32, i32, i32
  }
  func.func @transform_4(%arg0: i32) -> (i32, i32, i32) {
    %c0_i32 = arith.constant 0 : i32
    %c0_i32_0 = arith.constant 0 : i32
    %c0_i32_1 = arith.constant 0 : i32
    return %arg0, %c0_i32, %c0_i32_0 : i32, i32, i32
  }
}

module attributes {stable_mosaic.version = 11 : i64} {
  func.func @_gate_kernel(%arg0: i32, %arg1: i32, %arg2: memref<1x128x128xf32, #tpu.memory_space<vmem>>, %arg3: memref<1x128x1xf32, #tpu.memory_space<vmem>>, %arg4: memref<1x1x128xf32, #tpu.memory_space<vmem>>, %arg5: memref<1x128x128xf32, #tpu.memory_space<vmem>>) attributes {dimension_semantics = [#tpu.dimension_semantics<parallel>, #tpu.dimension_semantics<parallel>], iteration_bounds = array<i64: 2, 2>, scalar_prefetch = 0 : i64, scratch_operands = 0 : i64, tpu.core_type = #tpu.core_type<tc>, window_params = [{transform_indices = @transform_0, window_bounds = array<i64: 1, 128, 128>}, {transform_indices = @transform_1, window_bounds = array<i64: 1, 128, 1>}, {transform_indices = @transform_2, window_bounds = array<i64: 1, 1, 128>}, {transform_indices = @transform_3, window_bounds = array<i64: 1, 128, 128>}]} {
    %c0 = arith.constant 0 : index
    %c0_0 = arith.constant 0 : index
    %c0_1 = arith.constant 0 : index
    %0 = vector.load %arg2[%c0, %c0_0, %c0_1] : memref<1x128x128xf32, #tpu.memory_space<vmem>>, vector<1x128x128xf32>
    %1 = vector.shape_cast %0 : vector<1x128x128xf32> to vector<128x128xf32>
    %c0_2 = arith.constant 0 : index
    %c0_3 = arith.constant 0 : index
    %c0_4 = arith.constant 0 : index
    %2 = vector.load %arg3[%c0_2, %c0_3, %c0_4] : memref<1x128x1xf32, #tpu.memory_space<vmem>>, vector<1x128x1xf32>
    %3 = vector.shape_cast %2 : vector<1x128x1xf32> to vector<128x1xf32>
    %4 = vector.broadcast %3 : vector<128x1xf32> to vector<128x128xf32>
    %5 = arith.mulf %1, %4 : vector<128x128xf32>
    %c0_5 = arith.constant 0 : index
    %c0_6 = arith.constant 0 : index
    %c0_7 = arith.constant 0 : index
    %6 = vector.load %arg4[%c0_5, %c0_6, %c0_7] : memref<1x1x128xf32, #tpu.memory_space<vmem>>, vector<1x1x128xf32>
    %7 = vector.shape_cast %6 : vector<1x1x128xf32> to vector<1x128xf32>
    %8 = vector.broadcast %7 : vector<1x128xf32> to vector<128x128xf32>
    %9 = arith.mulf %5, %8 : vector<128x128xf32>
    %c0_8 = arith.constant 0 : index
    %c0_9 = arith.constant 0 : index
    %c0_10 = arith.constant 0 : index
    %10 = vector.load %arg5[%c0_8, %c0_9, %c0_10] : memref<1x128x128xf32, #tpu.memory_space<vmem>>, vector<1x128x128xf32>
    %11 = vector.shape_cast %10 : vector<1x128x128xf32> to vector<128x128xf32>
    %12 = vector.shape_cast %9 : vector<128x128xf32> to vector<1x128x128xf32>
    tpu.vector_store %arg5[%c0_8, %c0_9, %c0_10], %12 {strides = array<i32>} : memref<1x128x128xf32, #tpu.memory_space<vmem>>, vector<1x128x128xf32>,
    return
  }
  func.func @transform_0(%arg0: i32, %arg1: i32) -> (i32, i32, i32) {
    %c0_i32 = arith.constant 0 : i32
    %c0_i32_0 = arith.constant 0 : i32
    return %arg0, %c0_i32, %arg1 : i32, i32, i32
  }
  func.func @transform_1(%arg0: i32, %arg1: i32) -> (i32, i32, i32) {
    %c0_i32 = arith.constant 0 : i32
    %c0_i32_0 = arith.constant 0 : i32
    %c0_i32_1 = arith.constant 0 : i32
    return %arg0, %c0_i32, %c0_i32_0 : i32, i32, i32
  }
  func.func @transform_2(%arg0: i32, %arg1: i32) -> (i32, i32, i32) {
    %c0_i32 = arith.constant 0 : i32
    %c0_i32_0 = arith.constant 0 : i32
    return %arg0, %c0_i32, %arg1 : i32, i32, i32
  }
  func.func @transform_3(%arg0: i32, %arg1: i32) -> (i32, i32, i32) {
    %c0_i32 = arith.constant 0 : i32
    %c0_i32_0 = arith.constant 0 : i32
    return %arg0, %c0_i32, %arg1 : i32, i32, i32
  }
}

</mosaic_0001>

<llo_original>
// kernel: cbam_forward.3
$region0: #{cbam_forward.3}
  #allocation0 [shape = 'u32[]', space=smem, size = 0x4, offset = 0x4, fixed_abs, tag = 'smem constant byte address 0x4 - core index']
  #allocation1 [shape = 'u32[144,128]{1,0:T(1,128)}', space=vmem, size = 0x12000, scoped, tag = 'internal scratch']
  %s0 = inlined_call_operand.vmem [shape: f32[2,128,256], index: 0, kind: input, shape index: {}]
  %s1 = inlined_call_operand.vmem [shape: f32[2,128,1], index: 1, kind: input, shape index: {}]
  %s2 = inlined_call_operand.vmem [shape: f32[2,1,256], index: 2, kind: input, shape index: {}]
  %s3 = inlined_call_operand.vmem [shape: f32[2,128,256], index: 3, kind: output, shape index: {}]
  %s4 = sld [smem:[#allocation0]]
  $region117: #{cbam_forward.3} parent=0
    _
  %s6 = ssub.s32 1, %s4
  %s7 = scalar_select 0, %s6, %s4
  $region1: #{cbam_forward.3} parent=0
    #allocation2 [shape = 'u8[131072]{0}', space=vmem, size = 0x20000, scoped, tag = 'input window, operand 0']
    #allocation3 [shape = 'u8[131072]{0}', space=vmem, size = 0x20000, scoped, tag = 'output window, operand 0']
    loop: start=0, step=1, limit=6
    $region2: #{cbam_forward.3} parent=1 // loop_pre_header
      _
    $region3: #{cbam_forward.3} parent=1 // loop_header
      %s9 = sphi 0, %s13
      %p10 = scmp.ge.s32.totalorder %s9, 6
      %s16 = sphi 0, %s28
      %s17 = sphi 0, %s24
      %s18 = sphi 0, %s16
      %s19 = sphi 0, %s17
      %s20 = sphi 0, %s18
      %s21 = sphi 0, %s19
      %s33 = sphi 0, %s35
      %s36 = sphi 0, %s33
      %s37 = sphi 0, %s36
      %s53 = sphi 0, %s37
      %s59 = sphi 0, %s61
      %s62 = sphi 0, %s59
      %s63 = sphi 0, %s62
      %s79 = sphi 0, %s63
      %s87 = sphi 0, %s89
      %s90 = sphi 0, %s87
      %s91 = sphi 0, %s90
      %s107 = sphi 0, %s91
      %s115 = sphi 0, %s117
      %s118 = sphi 0, %s115
      %s119 = sphi 0, %s118
      %s135 = sphi 0, %s119
    $region4: #{cbam_forward.3} parent=1 // loop_header_branch
      %12 = sbr.rel (%p10) target = $region8
    $region5: #{cbam_forward.3} parent=1 // loop_body
      %s14 = ssub.s32 %s9, 1
      %s15 = ssub.s32 %s9, 2
      %s22 = sadd.s32 1, %s17
      %p23 = scmp.ge.s32.totalorder %s22, 2
      %s24 = scalar_select %p23, 0, %s22
      %s25 = sadd.s32 1, %s16
      %s26 = scalar_select %p23, %s25, %s16
      %p27 = scmp.ge.s32.totalorder %s26, 2
      %s28 = scalar_select %p27, 0, %s26
      %s29 = ssub.s32 %s16, %s28
      %s30 = ssub.s32 %s17, %s24
      %s31 = sor.u32 %s29, %s30
      %p32 = scmp.eq.s32.totalorder %s31, 0
      %s34 = sadd.s32 %s33, 1
      %s35 = scalar_select %p32, %s33, %s34
      %p38 = pneg %p32
      %p39 = scmp.eq.s32.totalorder %s9, 3
      %p40 = por %p38, %p39
      %p41 = scmp.ne.s32.totalorder %s33, %s36
      %p42 = scmp.eq.s32.totalorder %s9, 0
      %p43 = por %p41, %p42
      %p44 = scmp.ne.s32.totalorder %s33, %s36
      %p45 = scmp.eq.s32.totalorder %s14, 3
      %p46 = por %p44, %p45
      %p47 = scmp.ne.s32.totalorder %s36, %s37
      %p48 = scmp.eq.s32.totalorder %s14, 0
      %p49 = por %p47, %p48
      %p50 = scmp.ne.s32.totalorder %s36, %s37
      %p51 = scmp.eq.s32.totalorder %s15, 3
      %p52 = por %p50, %p51
      %p54 = scmp.ne.s32.totalorder %s37, %s53
      %p55 = scmp.eq.s32.totalorder %s15, 0
      %p56 = por %p54, %p55
      %s57 = ssub.s32 %s16, %s28
      %p58 = scmp.eq.s32.totalorder %s57, 0
      %s60 = sadd.s32 %s59, 1
      %s61 = scalar_select %p58, %s59, %s60
      %p64 = pneg %p58
      %p65 = scmp.eq.s32.totalorder %s9, 3
      %p66 = por %p64, %p65
      %p67 = scmp.ne.s32.totalorder %s59, %s62
      %p68 = scmp.eq.s32.totalorder %s9, 0
      %p69 = por %p67, %p68
      %p70 = scmp.ne.s32.totalorder %s59, %s62
      %p71 = scmp.eq.s32.totalorder %s14, 3
      %p72 = por %p70, %p71
      %p73 = scmp.ne.s32.totalorder %s62, %s63
      %p74 = scmp.eq.s32.totalorder %s14, 0
      %p75 = por %p73, %p74
      %p76 = scmp.ne.s32.totalorder %s62, %s63
      %p77 = scmp.eq.s32.totalorder %s15, 3
      %p78 = por %p76, %p77
      %p80 = scmp.ne.s32.totalorder %s63, %s79
      %p81 = scmp.eq.s32.totalorder %s15, 0
      %p82 = por %p80, %p81
      %s83 = ssub.s32 %s16, %s28
      %s84 = ssub.s32 %s17, %s24
      %s85 = sor.u32 %s83, %s84
      %p86 = scmp.eq.s32.totalorder %s85, 0
      %s88 = sadd.s32 %s87, 1
      %s89 = scalar_select %p86, %s87, %s88
      %p92 = pneg %p86
      %p93 = scmp.eq.s32.totalorder %s9, 3
      %p94 = por %p92, %p93
      %p95 = scmp.ne.s32.totalorder %s87, %s90
      %p96 = scmp.eq.s32.totalorder %s9, 0
      %p97 = por %p95, %p96
      %p98 = scmp.ne.s32.totalorder %s87, %s90
      %p99 = scmp.eq.s32.totalorder %s14, 3
      %p100 = por %p98, %p99
      %p101 = scmp.ne.s32.totalorder %s90, %s91
      %p102 = scmp.eq.s32.totalorder %s14, 0
      %p103 = por %p101, %p102
      %p104 = scmp.ne.s32.totalorder %s90, %s91
      %p105 = scmp.eq.s32.totalorder %s15, 3
      %p106 = por %p104, %p105
      %p108 = scmp.ne.s32.totalorder %s91, %s107
      %p109 = scmp.eq.s32.totalorder %s15, 0
      %p110 = por %p108, %p109
      %s111 = ssub.s32 %s16, %s28
      %s112 = ssub.s32 %s17, %s24
      %s113 = sor.u32 %s111, %s112
      %p114 = scmp.eq.s32.totalorder %s113, 0
      %s116 = sadd.s32 %s115, 1
      %s117 = scalar_select %p114, %s115, %s116
      %p120 = pneg %p114
      %p121 = scmp.eq.s32.totalorder %s9, 3
      %p122 = por %p120, %p121
      %p123 = scmp.ne.s32.totalorder %s115, %s118
      %p124 = scmp.eq.s32.totalorder %s9, 0
      %p125 = por %p123, %p124
      %p126 = scmp.ne.s32.totalorder %s115, %s118
      %p127 = scmp.eq.s32.totalorder %s14, 3
      %p128 = por %p126, %p127
      %p129 = scmp.ne.s32.totalorder %s118, %s119
      %p130 = scmp.eq.s32.totalorder %s14, 0
      %p131 = por %p129, %p130
      %p132 = scmp.ne.s32.totalorder %s118, %s119
      %p133 = scmp.eq.s32.totalorder %s15, 3
      %p134 = por %p132, %p133
      %p136 = scmp.ne.s32.totalorder %s119, %s135
      %p137 = scmp.eq.s32.totalorder %s15, 0
      %p138 = por %p136, %p137
      %p139 = scmp.le.s32.totalorder 1, %s9
      %p140 = scmp.lt.s32.totalorder %s9, 5
      %p141 = pnand %p139, %p140
      %p142 = pneg %p141
      // Predicated region
      $region9: #{cbam_forward.3} parent=5 // pred_check
        _
      $region10: #{cbam_forward.3} parent=5 // pred_check_branch
        %144 = sbr.rel (%p141) target = $region12
      $region11: #{cbam_forward.3} parent=5 // pred_region
        %s145 = ssub.s32 %s9, 1
      $region12: #{cbam_forward.3} parent=5 // pred_fallthru
        _
      %p146 = scmp.lt.s32.totalorder %s9, 4
      // Predicated region
      $region13: #{cbam_forward.3} parent=5 // pred_check
        %p147 = pneg %p146
      $region14: #{cbam_forward.3} parent=5 // pred_check_branch
        %149 = sbr.rel (%p147) target = $region16
      $region15: #{cbam_forward.3} parent=5 // pred_region
        // Predicated region
        $region17: #{cbam_forward.3} parent=15 // pred_check
          %p150 = pneg %p43
        $region18: #{cbam_forward.3} parent=15 // pred_check_branch
          %152 = sbr.rel (%p150) target = $region20
        $region19: #{cbam_forward.3} parent=15 // pred_region
          %s153 = sand.u32 %s33, 1
          %s154 = sand.u32 %s33, 1
          %s155 = smul.addr %s154, 128
          %s156 = scalar_lea.vmem [#allocation2], %s155
          %s157 = smul.addr %s16, 32
          %s158 = sadd.s32 %s17, %s157
          %s159 = smul.addr %s158, 8
          %s160 = scalar_lea.vmem %s0, %s159
          // Predicated region
          $region21: #{cbam_forward.3} parent=19 // pred_check
            _
          $region22: #{cbam_forward.3} parent=19 // pred_check_branch
            %162 = sbr.rel (0) target = $region24
          $region23: #{cbam_forward.3} parent=19 // pred_region
            // Predicated region
            $region25: #{cbam_forward.3} parent=23 // pred_check
              _
            $region26: #{cbam_forward.3} parent=23 // pred_check_branch
              %164 = sbr.rel (0) target = $region28
            $region27: #{cbam_forward.3} parent=23 // pred_region
              // Predicated region
              $region40: #{cbam_forward.3} parent=27 // pred_check
                _
              $region41: #{cbam_forward.3} parent=27 // pred_check_branch
                %209 = sbr.rel (0) target = $region43
              $region42: #{cbam_forward.3} parent=27 // pred_region
                loop: start=0, step=1, limit=1
                $region44: #{cbam_forward.3} parent=42 // loop_pre_header
                  _
                $region45: #{cbam_forward.3} parent=42 // loop_header
                  %s211 = sphi 0, %s215
                  %p212 = scmp.ge.s32.totalorder %s211, 1
                  %s216 = sphi %s160, %s160
                  %s217 = sphi %s156, %s156
                $region46: #{cbam_forward.3} parent=42 // loop_header_branch
                  %214 = sbr.rel (%p212) target = $region50
                $region47: #{cbam_forward.3} parent=42 // loop_body
                  %v218 = vld [vmem:[%s216] sm:$0xff]
                  %219 = vst [vmem:[%s217] sm:$0xff] %v218
                  %v220 = vld [vmem:[%s216 + $0x10] sm:$0xff]
                  %221 = vst [vmem:[%s217 + $0x8] sm:$0xff] %v220
                  %v222 = vld [vmem:[%s216 + $0x20] sm:$0xff]
                  %223 = vst [vmem:[%s217 + $0x10] sm:$0xff] %v222
                  %v224 = vld [vmem:[%s216 + $0x30] sm:$0xff]
                  %225 = vst [vmem:[%s217 + $0x18] sm:$0xff] %v224
                  %v226 = vld [vmem:[%s216 + $0x40] sm:$0xff]
                  %227 = vst [vmem:[%s217 + $0x20] sm:$0xff] %v226
                  %v228 = vld [vmem:[%s216 + $0x50] sm:$0xff]
                  %229 = vst [vmem:[%s217 + $0x28] sm:$0xff] %v228
                  %v230 = vld [vmem:[%s216 + $0x60] sm:$0xff]
                  %231 = vst [vmem:[%s217 + $0x30] sm:$0xff] %v230
                  %v232 = vld [vmem:[%s216 + $0x70] sm:$0xff]
                  %233 = vst [vmem:[%s217 + $0x38] sm:$0xff] %v232
                  %v234 = vld [vmem:[%s216 + $0x80] sm:$0xff]
                  %235 = vst [vmem:[%s217 + $0x40] sm:$0xff] %v234
                  %v236 = vld [vmem:[%s216 + $0x90] sm:$0xff]
                  %237 = vst [vmem:[%s217 + $0x48] sm:$0xff] %v236
                  %v238 = vld [vmem:[%s216 + $0xa0] sm:$0xff]
                  %239 = vst [vmem:[%s217 + $0x50] sm:$0xff] %v238
                  %v240 = vld [vmem:[%s216 + $0xb0] sm:$0xff]
                  %241 = vst [vmem:[%s217 + $0x58] sm:$0xff] %v240
                  %v242 = vld [vmem:[%s216 + $0xc0] sm:$0xff]
                  %243 = vst [vmem:[%s217 + $0x60] sm:$0xff] %v242
                  %v244 = vld [vmem:[%s216 + $0xd0] sm:$0xff]
                  %245 = vst [vmem:[%s217 + $0x68] sm:$0xff] %v244
                  %v246 = vld [vmem:[%s216 + $0xe0] sm:$0xff]
                  %247 = vst [vmem:[%s217 + $0x70] sm:$0xff] %v246
                  %v248 = vld [vmem:[%s216 + $0xf0] sm:$0xff]
                  %249 = vst [vmem:[%s217 + $0x78] sm:$0xff] %v248
                $region48: #{cbam_forward.3} parent=42 // loop_footer
                  %s215 = sadd.s32 1, %s211
                $region49: #{cbam_forward.3} parent=42 // loop_footer_branch
                  %210 = sbr.rel target = $region45
                $region50: #{cbam_forward.3} parent=42 // loop_exit
                  _
              $region43: #{cbam_forward.3} parent=27 // pred_fallthru
                _
              // Predicated region
              $region51: #{cbam_forward.3} parent=27 // pred_check
                _
              $region52: #{cbam_forward.3} parent=27 // pred_check_branch
                %251 = sbr.rel target = $region54
              $region53: #{cbam_forward.3} parent=27 // pred_region
                _
              $region54: #{cbam_forward.3} parent=27 // pred_fallthru
                _
            $region28: #{cbam_forward.3} parent=23 // pred_fallthru
              _
            // Predicated region
            $region29: #{cbam_forward.3} parent=23 // pred_check
              _
            $region30: #{cbam_forward.3} parent=23 // pred_check_branch
              %166 = sbr.rel target = $region32
            $region31: #{cbam_forward.3} parent=23 // pred_region
              loop: start=0, step=1, limit=1
              $region33: #{cbam_forward.3} parent=31 // loop_pre_header
                _
              $region34: #{cbam_forward.3} parent=31 // loop_header
                %s169 = sphi 0, %s173
                %p170 = scmp.ge.s32.totalorder %s169, 1
                %s174 = sphi %s160, %s160
                %s175 = sphi %s156, %s156
              $region35: #{cbam_forward.3} parent=31 // loop_header_branch
                %172 = sbr.rel (%p170) target = $region39
              $region36: #{cbam_forward.3} parent=31 // loop_body
                %v176 = vld [vmem:[%s174] sm:$0xff]
                %177 = vst [vmem:[%s175] sm:$0xff] %v176
                %v178 = vld [vmem:[%s174 + $0x10] sm:$0xff]
                %179 = vst [vmem:[%s175 + $0x8] sm:$0xff] %v178
                %v180 = vld [vmem:[%s174 + $0x20] sm:$0xff]
                %181 = vst [vmem:[%s175 + $0x10] sm:$0xff] %v180
                %v182 = vld [vmem:[%s174 + $0x30] sm:$0xff]
                %183 = vst [vmem:[%s175 + $0x18] sm:$0xff] %v182
                %v184 = vld [vmem:[%s174 + $0x40] sm:$0xff]
                %185 = vst [vmem:[%s175 + $0x20] sm:$0xff] %v184
                %v186 = vld [vmem:[%s174 + $0x50] sm:$0xff]
                %187 = vst [vmem:[%s175 + $0x28] sm:$0xff] %v186
                %v188 = vld [vmem:[%s174 + $0x60] sm:$0xff]
                %189 = vst [vmem:[%s175 + $0x30] sm:$0xff] %v188
                %v190 = vld [vmem:[%s174 + $0x70] sm:$0xff]
                %191 = vst [vmem:[%s175 + $0x38] sm:$0xff] %v190
                %v192 = vld [vmem:[%s174 + $0x80] sm:$0xff]
                %193 = vst [vmem:[%s175 + $0x40] sm:$0xff] %v192
                %v194 = vld [vmem:[%s174 + $0x90] sm:$0xff]
                %195 = vst [vmem:[%s175 + $0x48] sm:$0xff] %v194
                %v196 = vld [vmem:[%s174 + $0xa0] sm:$0xff]
                %197 = vst [vmem:[%s175 + $0x50] sm:$0xff] %v196
                %v198 = vld [vmem:[%s174 + $0xb0] sm:$0xff]
                %199 = vst [vmem:[%s175 + $0x58] sm:$0xff] %v198
                %v200 = vld [vmem:[%s174 + $0xc0] sm:$0xff]
                %201 = vst [vmem:[%s175 + $0x60] sm:$0xff] %v200
                %v202 = vld [vmem:[%s174 + $0xd0] sm:$0xff]
                %203 = vst [vmem:[%s175 + $0x68] sm:$0xff] %v202
                %v204 = vld [vmem:[%s174 + $0xe0] sm:$0xff]
                %205 = vst [vmem:[%s175 + $0x70] sm:$0xff] %v204
                %v206 = vld [vmem:[%s174 + $0xf0] sm:$0xff]
                %207 = vst [vmem:[%s175 + $0x78] sm:$0xff] %v206
              $region37: #{cbam_forward.3} parent=31 // loop_footer
                %s173 = sadd.s32 1, %s169
              $region38: #{cbam_forward.3} parent=31 // loop_footer_branch
                %168 = sbr.rel target = $region34
              $region39: #{cbam_forward.3} parent=31 // loop_exit
                _
            $region32: #{cbam_forward.3} parent=23 // pred_fallthru
              _
          $region24: #{cbam_forward.3} parent=19 // pred_fallthru
            _
          %252 = vnop
        $region20: #{cbam_forward.3} parent=15 // pred_fallthru
          _
        // Predicated region
        $region55: #{cbam_forward.3} parent=15 // pred_check
          %p253 = pneg %p69
        $region56: #{cbam_forward.3} parent=15 // pred_check_branch
          %255 = sbr.rel (%p253) target = $region58
        $region57: #{cbam_forward.3} parent=15 // pred_region
          %p256 = scmp.lt.s32.totalorder %s16, 1
          %s257 = scalar_select %p256, %s16, 1
          %s258 = smul.addr %s257, 16
          %s259 = smul.addr %s258, 8
          %s260 = scalar_lea.vmem %s1, %s259
        $region58: #{cbam_forward.3} parent=15 // pred_fallthru
          _
        // Predicated region
        $region59: #{cbam_forward.3} parent=15 // pred_check
          %p261 = pneg %p97
        $region60: #{cbam_forward.3} parent=15 // pred_check_branch
          %263 = sbr.rel (%p261) target = $region62
        $region61: #{cbam_forward.3} parent=15 // pred_region
          %p264 = scmp.lt.s32.totalorder %s16, 1
          %s265 = scalar_select %p264, %s16, 1
          %p266 = scmp.lt.s32.totalorder %s17, 1
          %s267 = scalar_select %p266, %s17, 1
          %s268 = smul.addr %s265, 2
          %s269 = sadd.s32 %s267, %s268
          %s270 = scalar_lea.vmem %s2, %s269
        $region62: #{cbam_forward.3} parent=15 // pred_fallthru
          _
      $region16: #{cbam_forward.3} parent=5 // pred_fallthru
        _
      %p271 = scmp.le.s32.totalorder 1, %s9
      %p272 = scmp.lt.s32.totalorder %s9, 5
      %p273 = pnand %p271, %p272
      %p274 = pneg %p273
      // Predicated region
      $region63: #{cbam_forward.3} parent=5 // pred_check
        _
      $region64: #{cbam_forward.3} parent=5 // pred_check_branch
        %276 = sbr.rel (%p273) target = $region66
      $region65: #{cbam_forward.3} parent=5 // pred_region
        %s277 = ssub.s32 %s9, 1
        %s278 = sand.u32 %s36, 1
        %s279 = sand.u32 %s36, 1
        %s280 = smul.addr %s279, 128
        %s281 = scalar_lea.vmem [#allocation2], %s280
        // Predicated region
        $region67: #{cbam_forward.3} parent=65 // pred_check
          %p282 = pneg %p49
        $region68: #{cbam_forward.3} parent=65 // pred_check_branch
          %284 = sbr.rel (%p282) target = $region70
        $region69: #{cbam_forward.3} parent=65 // pred_region
          _
        $region70: #{cbam_forward.3} parent=65 // pred_fallthru
          _
        %s285 = sand.u32 %s36, 1
        %s286 = sand.u32 %s36, 1
        %s287 = smul.addr %s286, 128
        %s288 = scalar_lea.vmem [#allocation2], %s287
        %p289 = pneg %p49
        %p290 = pneg %p46
        %p291 = scmp.lt.s32.totalorder %s18, 1
        %s292 = scalar_select %p291, %s18, 1
        %s293 = smul.addr %s292, 16
        %s294 = smul.addr %s293, 8
        %s295 = scalar_lea.vmem %s1, %s294
        %p296 = pneg %p75
        %p297 = pneg %p72
        %p298 = scmp.lt.s32.totalorder %s18, 1
        %s299 = scalar_select %p298, %s18, 1
        %p300 = scmp.lt.s32.totalorder %s19, 1
        %s301 = scalar_select %p300, %s19, 1
        %s302 = smul.addr %s299, 2
        %s303 = sadd.s32 %s301, %s302
        %s304 = scalar_lea.vmem %s2, %s303
        %p305 = pneg %p103
        %p306 = pneg %p100
        %p307 = pneg %p131
        %p308 = pneg %p128
        %s309 = sand.u32 %s118, 1
        %s310 = sand.u32 %s118, 1
        %s311 = smul.addr %s310, 128
        %s312 = scalar_lea.vmem [#allocation3], %s311
        %p313 = scmp.lt.s32.totalorder %s18, 1
        %s314 = scalar_select %p313, %s18, 1
        %s315 = smul.addr %s314, 16
        %s316 = smul.addr %s315, 8
        %s317 = scalar_lea.vmem %s1, %s316
        %p318 = scmp.lt.s32.totalorder %s18, 1
        %s319 = scalar_select %p318, %s18, 1
        %p320 = scmp.lt.s32.totalorder %s19, 1
        %s321 = scalar_select %p320, %s19, 1
        %s322 = smul.addr %s319, 2
        %s323 = sadd.s32 %s321, %s322
        %s324 = scalar_lea.vmem %s2, %s323
        %v325 = vld [vmem:[%s281] sm:$0xff]
        %v326 = vld [vmem:[%s281 + $0x8] sm:$0xff]
        %v327 = vld [vmem:[%s281 + $0x10] sm:$0xff]
        %v328 = vld [vmem:[%s281 + $0x18] sm:$0xff]
        %v329 = vld [vmem:[%s281 + $0x20] sm:$0xff]
        %v330 = vld [vmem:[%s281 + $0x28] sm:$0xff]
        %v331 = vld [vmem:[%s281 + $0x30] sm:$0xff]
        %v332 = vld [vmem:[%s281 + $0x38] sm:$0xff]
        %v333 = vld [vmem:[%s281 + $0x40] sm:$0xff]
        %v334 = vld [vmem:[%s281 + $0x48] sm:$0xff]
        %v335 = vld [vmem:[%s281 + $0x50] sm:$0xff]
        %v336 = vld [vmem:[%s281 + $0x58] sm:$0xff]
        %v337 = vld [vmem:[%s281 + $0x60] sm:$0xff]
        %v338 = vld [vmem:[%s281 + $0x68] sm:$0xff]
        %v339 = vld [vmem:[%s281 + $0x70] sm:$0xff]
        %v340 = vld [vmem:[%s281 + $0x78] sm:$0xff]
        %v341 = vld [vmem:[%s317] sm:$0xff]
        %v342 = vld [vmem:[%s317 + $0x8] sm:$0xff]
        %v343 = vld [vmem:[%s317 + $0x10] sm:$0xff]
        %v344 = vld [vmem:[%s317 + $0x18] sm:$0xff]
        %v345 = vld [vmem:[%s317 + $0x20] sm:$0xff]
        %v346 = vld [vmem:[%s317 + $0x28] sm:$0xff]
        %v347 = vld [vmem:[%s317 + $0x30] sm:$0xff]
        %v348 = vld [vmem:[%s317 + $0x38] sm:$0xff]
        %v349 = vld [vmem:[%s317 + $0x40] sm:$0xff]
        %v350 = vld [vmem:[%s317 + $0x48] sm:$0xff]
        %v351 = vld [vmem:[%s317 + $0x50] sm:$0xff]
        %v352 = vld [vmem:[%s317 + $0x58] sm:$0xff]
        %v353 = vld [vmem:[%s317 + $0x60] sm:$0xff]
        %v354 = vld [vmem:[%s317 + $0x68] sm:$0xff]
        %v355 = vld [vmem:[%s317 + $0x70] sm:$0xff]
        %v356 = vld [vmem:[%s317 + $0x78] sm:$0xff]
        %358 = vset.pattern.permute.xlu0 0
        %359 = vperm.xlu0 %358, %v341
        %v360 = vpop.permute.xlu0 %359
        %363 = vset.pattern.permute.xlu0 0
        %364 = vperm.xlu0 %363, %v342
        %v365 = vpop.permute.xlu0 %364
        %368 = vset.pattern.permute.xlu0 0
        %369 = vperm.xlu0 %368, %v343
        %v370 = vpop.permute.xlu0 %369
        %373 = vset.pattern.permute.xlu0 0
        %374 = vperm.xlu0 %373, %v344
        %v375 = vpop.permute.xlu0 %374
        %378 = vset.pattern.permute.xlu0 0
        %379 = vperm.xlu0 %378, %v345
        %v380 = vpop.permute.xlu0 %379
        %383 = vset.pattern.permute.xlu0 0
        %384 = vperm.xlu0 %383, %v346
        %v385 = vpop.permute.xlu0 %384
        %388 = vset.pattern.permute.xlu0 0
        %389 = vperm.xlu0 %388, %v347
        %v390 = vpop.permute.xlu0 %389
        %393 = vset.pattern.permute.xlu0 0
        %394 = vperm.xlu0 %393, %v348
        %v395 = vpop.permute.xlu0 %394
        %398 = vset.pattern.permute.xlu0 0
        %399 = vperm.xlu0 %398, %v349
        %v400 = vpop.permute.xlu0 %399
        %403 = vset.pattern.permute.xlu0 0
        %404 = vperm.xlu0 %403, %v350
        %v405 = vpop.permute.xlu0 %404
        %408 = vset.pattern.permute.xlu0 0
        %409 = vperm.xlu0 %408, %v351
        %v410 = vpop.permute.xlu0 %409
        %413 = vset.pattern.permute.xlu0 0
        %414 = vperm.xlu0 %413, %v352
        %v415 = vpop.permute.xlu0 %414
        %418 = vset.pattern.permute.xlu0 0
        %419 = vperm.xlu0 %418, %v353
        %v420 = vpop.permute.xlu0 %419
        %423 = vset.pattern.permute.xlu0 0
        %424 = vperm.xlu0 %423, %v354
        %v425 = vpop.permute.xlu0 %424
        %428 = vset.pattern.permute.xlu0 0
        %429 = vperm.xlu0 %428, %v355
        %v430 = vpop.permute.xlu0 %429
        %433 = vset.pattern.permute.xlu0 0
        %434 = vperm.xlu0 %433, %v356
        %v435 = vpop.permute.xlu0 %434
        %v437 = vmul.f32 %v325, %v360
        %v438 = vmul.f32 %v326, %v365
        %v439 = vmul.f32 %v327, %v370
        %v440 = vmul.f32 %v328, %v375
        %v441 = vmul.f32 %v329, %v380
        %v442 = vmul.f32 %v330, %v385
        %v443 = vmul.f32 %v331, %v390
        %v444 = vmul.f32 %v332, %v395
        %v445 = vmul.f32 %v333, %v400
        %v446 = vmul.f32 %v334, %v405
        %v447 = vmul.f32 %v335, %v410
        %v448 = vmul.f32 %v336, %v415
        %v449 = vmul.f32 %v337, %v420
        %v450 = vmul.f32 %v338, %v425
        %v451 = vmul.f32 %v339, %v430
        %v452 = vmul.f32 %v340, %v435
        %v453 = vld [vmem:[%s324] sm:$0x1]
        %v455 = vlaneseq
        %v456 = vshrl.u32 %v455, 7
        %v457 = vsub.s32 0, %v456
        %v458 = vrot.slane %v453, %v457
        %v460 = vmul.f32 %v437, %v458
        %v461 = vmul.f32 %v438, %v458
        %v462 = vmul.f32 %v439, %v458
        %v463 = vmul.f32 %v440, %v458
        %v464 = vmul.f32 %v441, %v458
        %v465 = vmul.f32 %v442, %v458
        %v466 = vmul.f32 %v443, %v458
        %v467 = vmul.f32 %v444, %v458
        %v468 = vmul.f32 %v445, %v458
        %v469 = vmul.f32 %v446, %v458
        %v470 = vmul.f32 %v447, %v458
        %v471 = vmul.f32 %v448, %v458
        %v472 = vmul.f32 %v449, %v458
        %v473 = vmul.f32 %v450, %v458
        %v474 = vmul.f32 %v451, %v458
        %v475 = vmul.f32 %v452, %v458
        %476 = vst [vmem:[%s312] sm:$0xff] %v460
        %477 = vst [vmem:[%s312 + $0x8] sm:$0xff] %v461
        %478 = vst [vmem:[%s312 + $0x10] sm:$0xff] %v462
        %479 = vst [vmem:[%s312 + $0x18] sm:$0xff] %v463
        %480 = vst [vmem:[%s312 + $0x20] sm:$0xff] %v464
        %481 = vst [vmem:[%s312 + $0x28] sm:$0xff] %v465
        %482 = vst [vmem:[%s312 + $0x30] sm:$0xff] %v466
        %483 = vst [vmem:[%s312 + $0x38] sm:$0xff] %v467
        %484 = vst [vmem:[%s312 + $0x40] sm:$0xff] %v468
        %485 = vst [vmem:[%s312 + $0x48] sm:$0xff] %v469
        %486 = vst [vmem:[%s312 + $0x50] sm:$0xff] %v470
        %487 = vst [vmem:[%s312 + $0x58] sm:$0xff] %v471
        %488 = vst [vmem:[%s312 + $0x60] sm:$0xff] %v472
        %489 = vst [vmem:[%s312 + $0x68] sm:$0xff] %v473
        %490 = vst [vmem:[%s312 + $0x70] sm:$0xff] %v474
        %491 = vst [vmem:[%s312 + $0x78] sm:$0xff] %v475
        %s492 = sand.u32 %s118, 1
        %s493 = sand.u32 %s118, 1
        %s494 = smul.addr %s493, 128
        %s495 = scalar_lea.vmem [#allocation3], %s494
        // Predicated region
        $region71: #{cbam_forward.3} parent=65 // pred_check
          %p496 = pneg %p128
        $region72: #{cbam_forward.3} parent=65 // pred_check_branch
          %498 = sbr.rel (%p496) target = $region74
        $region73: #{cbam_forward.3} parent=65 // pred_region
          %s499 = smul.addr %s18, 32
          %s500 = sadd.s32 %s19, %s499
          %s501 = smul.addr %s500, 8
          %s502 = scalar_lea.vmem %s3, %s501
          // Predicated region
          $region75: #{cbam_forward.3} parent=73 // pred_check
            _
          $region76: #{cbam_forward.3} parent=73 // pred_check_branch
            %504 = sbr.rel (0) target = $region78
          $region77: #{cbam_forward.3} parent=73 // pred_region
            // Predicated region
            $region79: #{cbam_forward.3} parent=77 // pred_check
              _
            $region80: #{cbam_forward.3} parent=77 // pred_check_branch
              %506 = sbr.rel (0) target = $region82
            $region81: #{cbam_forward.3} parent=77 // pred_region
              // Predicated region
              $region94: #{cbam_forward.3} parent=81 // pred_check
                _
              $region95: #{cbam_forward.3} parent=81 // pred_check_branch
                %551 = sbr.rel (0) target = $region97
              $region96: #{cbam_forward.3} parent=81 // pred_region
                loop: start=0, step=1, limit=1
                $region98: #{cbam_forward.3} parent=96 // loop_pre_header
                  _
                $region99: #{cbam_forward.3} parent=96 // loop_header
                  %s553 = sphi 0, %s557
                  %p554 = scmp.ge.s32.totalorder %s553, 1
                  %s558 = sphi %s495, %s495
                  %s559 = sphi %s502, %s502
                $region100: #{cbam_forward.3} parent=96 // loop_header_branch
                  %556 = sbr.rel (%p554) target = $region104
                $region101: #{cbam_forward.3} parent=96 // loop_body
                  %v560 = vld [vmem:[%s558] sm:$0xff]
                  %561 = vst [vmem:[%s559] sm:$0xff] %v560
                  %v562 = vld [vmem:[%s558 + $0x8] sm:$0xff]
                  %563 = vst [vmem:[%s559 + $0x10] sm:$0xff] %v562
                  %v564 = vld [vmem:[%s558 + $0x10] sm:$0xff]
                  %565 = vst [vmem:[%s559 + $0x20] sm:$0xff] %v564
                  %v566 = vld [vmem:[%s558 + $0x18] sm:$0xff]
                  %567 = vst [vmem:[%s559 + $0x30] sm:$0xff] %v566
                  %v568 = vld [vmem:[%s558 + $0x20] sm:$0xff]
                  %569 = vst [vmem:[%s559 + $0x40] sm:$0xff] %v568
                  %v570 = vld [vmem:[%s558 + $0x28] sm:$0xff]
                  %571 = vst [vmem:[%s559 + $0x50] sm:$0xff] %v570
                  %v572 = vld [vmem:[%s558 + $0x30] sm:$0xff]
                  %573 = vst [vmem:[%s559 + $0x60] sm:$0xff] %v572
                  %v574 = vld [vmem:[%s558 + $0x38] sm:$0xff]
                  %575 = vst [vmem:[%s559 + $0x70] sm:$0xff] %v574
                  %v576 = vld [vmem:[%s558 + $0x40] sm:$0xff]
                  %577 = vst [vmem:[%s559 + $0x80] sm:$0xff] %v576
                  %v578 = vld [vmem:[%s558 + $0x48] sm:$0xff]
                  %579 = vst [vmem:[%s559 + $0x90] sm:$0xff] %v578
                  %v580 = vld [vmem:[%s558 + $0x50] sm:$0xff]
                  %581 = vst [vmem:[%s559 + $0xa0] sm:$0xff] %v580
                  %v582 = vld [vmem:[%s558 + $0x58] sm:$0xff]
                  %583 = vst [vmem:[%s559 + $0xb0] sm:$0xff] %v582
                  %v584 = vld [vmem:[%s558 + $0x60] sm:$0xff]
                  %585 = vst [vmem:[%s559 + $0xc0] sm:$0xff] %v584
                  %v586 = vld [vmem:[%s558 + $0x68] sm:$0xff]
                  %587 = vst [vmem:[%s559 + $0xd0] sm:$0xff] %v586
                  %v588 = vld [vmem:[%s558 + $0x70] sm:$0xff]
                  %589 = vst [vmem:[%s559 + $0xe0] sm:$0xff] %v588
                  %v590 = vld [vmem:[%s558 + $0x78] sm:$0xff]
                  %591 = vst [vmem:[%s559 + $0xf0] sm:$0xff] %v590
                $region102: #{cbam_forward.3} parent=96 // loop_footer
                  %s557 = sadd.s32 1, %s553
                $region103: #{cbam_forward.3} parent=96 // loop_footer_branch
                  %552 = sbr.rel target = $region99
                $region104: #{cbam_forward.3} parent=96 // loop_exit
                  _
              $region97: #{cbam_forward.3} parent=81 // pred_fallthru
                _
              // Predicated region
              $region105: #{cbam_forward.3} parent=81 // pred_check
                _
              $region106: #{cbam_forward.3} parent=81 // pred_check_branch
                %593 = sbr.rel target = $region108
              $region107: #{cbam_forward.3} parent=81 // pred_region
                _
              $region108: #{cbam_forward.3} parent=81 // pred_fallthru
                _
            $region82: #{cbam_forward.3} parent=77 // pred_fallthru
              _
            // Predicated region
            $region83: #{cbam_forward.3} parent=77 // pred_check
              _
            $region84: #{cbam_forward.3} parent=77 // pred_check_branch
              %508 = sbr.rel target = $region86
            $region85: #{cbam_forward.3} parent=77 // pred_region
              loop: start=0, step=1, limit=1
              $region87: #{cbam_forward.3} parent=85 // loop_pre_header
                _
              $region88: #{cbam_forward.3} parent=85 // loop_header
                %s511 = sphi 0, %s515
                %p512 = scmp.ge.s32.totalorder %s511, 1
                %s516 = sphi %s495, %s495
                %s517 = sphi %s502, %s502
              $region89: #{cbam_forward.3} parent=85 // loop_header_branch
                %514 = sbr.rel (%p512) target = $region93
              $region90: #{cbam_forward.3} parent=85 // loop_body
                %v518 = vld [vmem:[%s516] sm:$0xff]
                %519 = vst [vmem:[%s517] sm:$0xff] %v518
                %v520 = vld [vmem:[%s516 + $0x8] sm:$0xff]
                %521 = vst [vmem:[%s517 + $0x10] sm:$0xff] %v520
                %v522 = vld [vmem:[%s516 + $0x10] sm:$0xff]
                %523 = vst [vmem:[%s517 + $0x20] sm:$0xff] %v522
                %v524 = vld [vmem:[%s516 + $0x18] sm:$0xff]
                %525 = vst [vmem:[%s517 + $0x30] sm:$0xff] %v524
                %v526 = vld [vmem:[%s516 + $0x20] sm:$0xff]
                %527 = vst [vmem:[%s517 + $0x40] sm:$0xff] %v526
                %v528 = vld [vmem:[%s516 + $0x28] sm:$0xff]
                %529 = vst [vmem:[%s517 + $0x50] sm:$0xff] %v528
                %v530 = vld [vmem:[%s516 + $0x30] sm:$0xff]
                %531 = vst [vmem:[%s517 + $0x60] sm:$0xff] %v530
                %v532 = vld [vmem:[%s516 + $0x38] sm:$0xff]
                %533 = vst [vmem:[%s517 + $0x70] sm:$0xff] %v532
                %v534 = vld [vmem:[%s516 + $0x40] sm:$0xff]
                %535 = vst [vmem:[%s517 + $0x80] sm:$0xff] %v534
                %v536 = vld [vmem:[%s516 + $0x48] sm:$0xff]
                %537 = vst [vmem:[%s517 + $0x90] sm:$0xff] %v536
                %v538 = vld [vmem:[%s516 + $0x50] sm:$0xff]
                %539 = vst [vmem:[%s517 + $0xa0] sm:$0xff] %v538
                %v540 = vld [vmem:[%s516 + $0x58] sm:$0xff]
                %541 = vst [vmem:[%s517 + $0xb0] sm:$0xff] %v540
                %v542 = vld [vmem:[%s516 + $0x60] sm:$0xff]
                %543 = vst [vmem:[%s517 + $0xc0] sm:$0xff] %v542
                %v544 = vld [vmem:[%s516 + $0x68] sm:$0xff]
                %545 = vst [vmem:[%s517 + $0xd0] sm:$0xff] %v544
                %v546 = vld [vmem:[%s516 + $0x70] sm:$0xff]
                %547 = vst [vmem:[%s517 + $0xe0] sm:$0xff] %v546
                %v548 = vld [vmem:[%s516 + $0x78] sm:$0xff]
                %549 = vst [vmem:[%s517 + $0xf0] sm:$0xff] %v548
              $region91: #{cbam_forward.3} parent=85 // loop_footer
                %s515 = sadd.s32 1, %s511
              $region92: #{cbam_forward.3} parent=85 // loop_footer_branch
                %510 = sbr.rel target = $region88
              $region93: #{cbam_forward.3} parent=85 // loop_exit
                _
            $region86: #{cbam_forward.3} parent=77 // pred_fallthru
              _
          $region78: #{cbam_forward.3} parent=73 // pred_fallthru
            _
          %594 = vnop
        $region74: #{cbam_forward.3} parent=65 // pred_fallthru
          _
      $region66: #{cbam_forward.3} parent=5 // pred_fallthru
        _
      %p595 = scmp.le.s32.totalorder 2, %s9
      // Predicated region
      $region109: #{cbam_forward.3} parent=5 // pred_check
        %p596 = pneg %p595
      $region110: #{cbam_forward.3} parent=5 // pred_check_branch
        %598 = sbr.rel (%p596) target = $region112
      $region111: #{cbam_forward.3} parent=5 // pred_region
        %s599 = ssub.s32 %s9, 2
        // Predicated region
        $region113: #{cbam_forward.3} parent=111 // pred_check
          %p600 = pneg %p134
        $region114: #{cbam_forward.3} parent=111 // pred_check_branch
          %602 = sbr.rel (%p600) target = $region116
        $region115: #{cbam_forward.3} parent=111 // pred_region
          %s603 = sand.u32 %s119, 1
          %s604 = sand.u32 %s119, 1
          %s605 = smul.addr %s604, 128
          %s606 = scalar_lea.vmem [#allocation3], %s605
        $region116: #{cbam_forward.3} parent=111 // pred_fallthru
          _
      $region112: #{cbam_forward.3} parent=5 // pred_fallthru
        _
    $region6: #{cbam_forward.3} parent=1 // loop_footer
      %s13 = sadd.s32 1, %s9
    $region7: #{cbam_forward.3} parent=1 // loop_footer_branch
      %8 = sbr.rel target = $region3
    $region8: #{cbam_forward.3} parent=1 // loop_exit
      _

// kernel: cbam_forward.2
$region0: #{cbam_forward.2}
  #allocation0 [shape = 'u32[]', space=smem, size = 0x4, offset = 0x4, fixed_abs, tag = 'smem constant byte address 0x4 - core index']
  #allocation1 [shape = 'u32[144,128]{1,0:T(1,128)}', space=vmem, size = 0x12000, scoped, tag = 'internal scratch']
  %s0 = inlined_call_operand.vmem [shape: f32[2,128,256], index: 0, kind: input, shape index: {}]
  %s1 = inlined_call_operand.vmem [shape: f32[128,8], index: 1, kind: input, shape index: {}]
  %s2 = inlined_call_operand.vmem [shape: f32[128,8], index: 2, kind: input, shape index: {}]
  %s3 = inlined_call_operand.vmem [shape: f32[2,128,1], index: 3, kind: output, shape index: {0}]
  %s4 = inlined_call_operand.vmem [shape: f32[2,2,256], index: 4, kind: output, shape index: {1}]
  %5 = xla_tuple %s3, %s4
  %s6 = sld [smem:[#allocation0]]
  $region53: #{cbam_forward.2} parent=0
    _
  %s8 = ssub.s32 1, %s6
  %s9 = scalar_select 0, %s8, %s6
  loop: start=0, step=1, limit=4
  $region2: #{cbam_forward.2} parent=0 // loop_pre_header
    _
  $region3: #{cbam_forward.2} parent=0 // loop_header
    %s11 = sphi 0, %s15
    %p12 = scmp.ge.s32.totalorder %s11, 4
    %s21 = sphi 0, %s23
    %s24 = sphi 0, %s21
    %s25 = sphi 0, %s24
    %s41 = sphi 0, %s25
    %s45 = sphi 0, %s45
    %s47 = sphi 0, %s45
    %s48 = sphi 0, %s47
    %s62 = sphi 0, %s48
    %s66 = sphi 0, %s66
    %s68 = sphi 0, %s66
    %s69 = sphi 0, %s68
    %s83 = sphi 0, %s69
    %s89 = sphi 0, %s91
    %s92 = sphi 0, %s89
    %s93 = sphi 0, %s92
    %s109 = sphi 0, %s93
    %s115 = sphi 0, %s117
    %s118 = sphi 0, %s115
    %s119 = sphi 0, %s118
    %s135 = sphi 0, %s119
  $region4: #{cbam_forward.2} parent=0 // loop_header_branch
    %14 = sbr.rel (%p12) target = $region8
  $region5: #{cbam_forward.2} parent=0 // loop_body
    %s16 = ssub.s32 %s11, 1
    %s17 = ssub.s32 %s11, 2
    %s18 = sadd.s32 %s11, 1
    %s19 = ssub.s32 %s11, %s18
    %p20 = scmp.eq.s32.totalorder %s19, 0
    %s22 = sadd.s32 %s21, 1
    %s23 = scalar_select %p20, %s21, %s22
    %p26 = pneg %p20
    %p27 = scmp.eq.s32.totalorder %s11, 1
    %p28 = por %p26, %p27
    %p29 = scmp.ne.s32.totalorder %s21, %s24
    %p30 = scmp.eq.s32.totalorder %s11, 0
    %p31 = por %p29, %p30
    %p32 = scmp.ne.s32.totalorder %s21, %s24
    %p33 = scmp.eq.s32.totalorder %s16, 1
    %p34 = por %p32, %p33
    %p35 = scmp.ne.s32.totalorder %s24, %s25
    %p36 = scmp.eq.s32.totalorder %s16, 0
    %p37 = por %p35, %p36
    %p38 = scmp.ne.s32.totalorder %s24, %s25
    %p39 = scmp.eq.s32.totalorder %s17, 1
    %p40 = por %p38, %p39
    %p42 = scmp.ne.s32.totalorder %s25, %s41
    %p43 = scmp.eq.s32.totalorder %s17, 0
    %p44 = por %p42, %p43
    %s46 = sadd.s32 %s45, 1
    %p49 = scmp.eq.s32.totalorder %s11, 1
    %p50 = scmp.ne.s32.totalorder %s45, %s47
    %p51 = scmp.eq.s32.totalorder %s11, 0
    %p52 = por %p50, %p51
    %p53 = scmp.ne.s32.totalorder %s45, %s47
    %p54 = scmp.eq.s32.totalorder %s16, 1
    %p55 = por %p53, %p54
    %p56 = scmp.ne.s32.totalorder %s47, %s48
    %p57 = scmp.eq.s32.totalorder %s16, 0
    %p58 = por %p56, %p57
    %p59 = scmp.ne.s32.totalorder %s47, %s48
    %p60 = scmp.eq.s32.totalorder %s17, 1
    %p61 = por %p59, %p60
    %p63 = scmp.ne.s32.totalorder %s48, %s62
    %p64 = scmp.eq.s32.totalorder %s17, 0
    %p65 = por %p63, %p64
    %s67 = sadd.s32 %s66, 1
    %p70 = scmp.eq.s32.totalorder %s11, 1
    %p71 = scmp.ne.s32.totalorder %s66, %s68
    %p72 = scmp.eq.s32.totalorder %s11, 0
    %p73 = por %p71, %p72
    %p74 = scmp.ne.s32.totalorder %s66, %s68
    %p75 = scmp.eq.s32.totalorder %s16, 1
    %p76 = por %p74, %p75
    %p77 = scmp.ne.s32.totalorder %s68, %s69
    %p78 = scmp.eq.s32.totalorder %s16, 0
    %p79 = por %p77, %p78
    %p80 = scmp.ne.s32.totalorder %s68, %s69
    %p81 = scmp.eq.s32.totalorder %s17, 1
    %p82 = por %p80, %p81
    %p84 = scmp.ne.s32.totalorder %s69, %s83
    %p85 = scmp.eq.s32.totalorder %s17, 0
    %p86 = por %p84, %p85
    %s87 = ssub.s32 %s11, %s18
    %p88 = scmp.eq.s32.totalorder %s87, 0
    %s90 = sadd.s32 %s89, 1
    %s91 = scalar_select %p88, %s89, %s90
    %p94 = pneg %p88
    %p95 = scmp.eq.s32.totalorder %s11, 1
    %p96 = por %p94, %p95
    %p97 = scmp.ne.s32.totalorder %s89, %s92
    %p98 = scmp.eq.s32.totalorder %s11, 0
    %p99 = por %p97, %p98
    %p100 = scmp.ne.s32.totalorder %s89, %s92
    %p101 = scmp.eq.s32.totalorder %s16, 1
    %p102 = por %p100, %p101
    %p103 = scmp.ne.s32.totalorder %s92, %s93
    %p104 = scmp.eq.s32.totalorder %s16, 0
    %p105 = por %p103, %p104
    %p106 = scmp.ne.s32.totalorder %s92, %s93
    %p107 = scmp.eq.s32.totalorder %s17, 1
    %p108 = por %p106, %p107
    %p110 = scmp.ne.s32.totalorder %s93, %s109
    %p111 = scmp.eq.s32.totalorder %s17, 0
    %p112 = por %p110, %p111
    %s113 = ssub.s32 %s11, %s18
    %p114 = scmp.eq.s32.totalorder %s113, 0
    %s116 = sadd.s32 %s115, 1
    %s117 = scalar_select %p114, %s115, %s116
    %p120 = pneg %p114
    %p121 = scmp.eq.s32.totalorder %s11, 1
    %p122 = por %p120, %p121
    %p123 = scmp.ne.s32.totalorder %s115, %s118
    %p124 = scmp.eq.s32.totalorder %s11, 0
    %p125 = por %p123, %p124
    %p126 = scmp.ne.s32.totalorder %s115, %s118
    %p127 = scmp.eq.s32.totalorder %s16, 1
    %p128 = por %p126, %p127
    %p129 = scmp.ne.s32.totalorder %s118, %s119
    %p130 = scmp.eq.s32.totalorder %s16, 0
    %p131 = por %p129, %p130
    %p132 = scmp.ne.s32.totalorder %s118, %s119
    %p133 = scmp.eq.s32.totalorder %s17, 1
    %p134 = por %p132, %p133
    %p136 = scmp.ne.s32.totalorder %s119, %s135
    %p137 = scmp.eq.s32.totalorder %s17, 0
    %p138 = por %p136, %p137
    %p139 = scmp.le.s32.totalorder 1, %s11
    %p140 = scmp.lt.s32.totalorder %s11, 3
    %p141 = pnand %p139, %p140
    %p142 = pneg %p141
    // Predicated region
    $region9: #{cbam_forward.2} parent=5 // pred_check
      _
    $region10: #{cbam_forward.2} parent=5 // pred_check_branch
      %144 = sbr.rel (%p141) target = $region12
    $region11: #{cbam_forward.2} parent=5 // pred_region
      %s145 = ssub.s32 %s11, 1
      // Predicated region
      $region13: #{cbam_forward.2} parent=11 // pred_check
        %p146 = pneg %p58
      $region14: #{cbam_forward.2} parent=11 // pred_check_branch
        %148 = sbr.rel (%p146) target = $region16
      $region15: #{cbam_forward.2} parent=11 // pred_region
        _
      $region16: #{cbam_forward.2} parent=11 // pred_fallthru
        _
      // Predicated region
      $region17: #{cbam_forward.2} parent=11 // pred_check
        %p149 = pneg %p79
      $region18: #{cbam_forward.2} parent=11 // pred_check_branch
        %151 = sbr.rel (%p149) target = $region20
      $region19: #{cbam_forward.2} parent=11 // pred_region
        _
      $region20: #{cbam_forward.2} parent=11 // pred_fallthru
        _
    $region12: #{cbam_forward.2} parent=5 // pred_fallthru
      _
    %p152 = scmp.lt.s32.totalorder %s11, 2
    // Predicated region
    $region21: #{cbam_forward.2} parent=5 // pred_check
      %p153 = pneg %p152
    $region22: #{cbam_forward.2} parent=5 // pred_check_branch
      %155 = sbr.rel (%p153) target = $region24
    $region23: #{cbam_forward.2} parent=5 // pred_region
      // Predicated region
      $region25: #{cbam_forward.2} parent=23 // pred_check
        %p156 = pneg %p31
      $region26: #{cbam_forward.2} parent=23 // pred_check_branch
        %158 = sbr.rel (%p156) target = $region28
      $region27: #{cbam_forward.2} parent=23 // pred_region
        %p159 = scmp.lt.s32.totalorder %s11, 1
        %s160 = scalar_select %p159, %s11, 1
        %s161 = smul.addr %s160, 32
        %s162 = smul.addr %s161, 8
        %s163 = scalar_lea.vmem %s0, %s162
      $region28: #{cbam_forward.2} parent=23 // pred_fallthru
        _
    $region24: #{cbam_forward.2} parent=5 // pred_fallthru
      _
    %p164 = scmp.le.s32.totalorder 1, %s11
    %p165 = scmp.lt.s32.totalorder %s11, 3
    %p166 = pnand %p164, %p165
    %p167 = pneg %p166
    // Predicated region
    $region29: #{cbam_forward.2} parent=5 // pred_check
      _
    $region30: #{cbam_forward.2} parent=5 // pred_check_branch
      %169 = sbr.rel (%p166) target = $region32
    $region31: #{cbam_forward.2} parent=5 // pred_region
      %s170 = ssub.s32 %s11, 1
      %p171 = scmp.lt.s32.totalorder %s16, 1
      %s172 = scalar_select %p171, %s16, 1
      %s173 = smul.addr %s172, 32
      %s174 = smul.addr %s173, 8
      %s175 = scalar_lea.vmem %s0, %s174
      %p176 = pneg %p37
      %p177 = pneg %p34
      %p178 = pneg %p58
      %p179 = pneg %p55
      %p180 = pneg %p79
      %p181 = pneg %p76
      %p182 = pneg %p105
      %p183 = pneg %p102
      %p184 = scmp.lt.s32.totalorder %s16, 1
      %s185 = scalar_select %p184, %s16, 1
      %s186 = smul.addr %s185, 16
      %s187 = smul.addr %s186, 8
      %s188 = scalar_lea.vmem %s3, %s187
      %p189 = pneg %p131
      %p190 = pneg %p128
      %p191 = scmp.lt.s32.totalorder %s16, 1
      %s192 = scalar_select %p191, %s16, 1
      %s193 = smul.addr %s192, 2
      %s194 = smul.addr %s193, 2
      %s195 = scalar_lea.vmem %s4, %s194
      %p196 = scmp.lt.s32.totalorder %s16, 1
      %s197 = scalar_select %p196, %s16, 1
      %s198 = smul.addr %s197, 32
      %s199 = smul.addr %s198, 8
      %s200 = scalar_lea.vmem %s0, %s199
      %p201 = scmp.lt.s32.totalorder %s16, 1
      %s202 = scalar_select %p201, %s16, 1
      %s203 = smul.addr %s202, 16
      %s204 = smul.addr %s203, 8
      %s205 = scalar_lea.vmem %s3, %s204
      %p206 = scmp.lt.s32.totalorder %s16, 1
      %s207 = scalar_select %p206, %s16, 1
      %s208 = smul.addr %s207, 2
      %s209 = smul.addr %s208, 2
      %s210 = scalar_lea.vmem %s4, %s209
      %v211 = vld [vmem:[%s200] sm:$0xff]
      %v212 = vld [vmem:[%s200 + $0x8] sm:$0xff]
      %v213 = vld [vmem:[%s200 + $0x10] sm:$0xff]
      %v214 = vld [vmem:[%s200 + $0x18] sm:$0xff]
      %v215 = vld [vmem:[%s200 + $0x20] sm:$0xff]
      %v216 = vld [vmem:[%s200 + $0x28] sm:$0xff]
      %v217 = vld [vmem:[%s200 + $0x30] sm:$0xff]
      %v218 = vld [vmem:[%s200 + $0x38] sm:$0xff]
      %v219 = vld [vmem:[%s200 + $0x40] sm:$0xff]
      %v220 = vld [vmem:[%s200 + $0x48] sm:$0xff]
      %v221 = vld [vmem:[%s200 + $0x50] sm:$0xff]
      %v222 = vld [vmem:[%s200 + $0x58] sm:$0xff]
      %v223 = vld [vmem:[%s200 + $0x60] sm:$0xff]
      %v224 = vld [vmem:[%s200 + $0x68] sm:$0xff]
      %v225 = vld [vmem:[%s200 + $0x70] sm:$0xff]
      %v226 = vld [vmem:[%s200 + $0x78] sm:$0xff]
      %v227 = vld [vmem:[%s200 + $0x80] sm:$0xff]
      %v228 = vld [vmem:[%s200 + $0x88] sm:$0xff]
      %v229 = vld [vmem:[%s200 + $0x90] sm:$0xff]
      %v230 = vld [vmem:[%s200 + $0x98] sm:$0xff]
      %v231 = vld [vmem:[%s200 + $0xa0] sm:$0xff]
      %v232 = vld [vmem:[%s200 + $0xa8] sm:$0xff]
      %v233 = vld [vmem:[%s200 + $0xb0] sm:$0xff]
      %v234 = vld [vmem:[%s200 + $0xb8] sm:$0xff]
      %v235 = vld [vmem:[%s200 + $0xc0] sm:$0xff]
      %v236 = vld [vmem:[%s200 + $0xc8] sm:$0xff]
      %v237 = vld [vmem:[%s200 + $0xd0] sm:$0xff]
      %v238 = vld [vmem:[%s200 + $0xd8] sm:$0xff]
      %v239 = vld [vmem:[%s200 + $0xe0] sm:$0xff]
      %v240 = vld [vmem:[%s200 + $0xe8] sm:$0xff]
      %v241 = vld [vmem:[%s200 + $0xf0] sm:$0xff]
      %v242 = vld [vmem:[%s200 + $0xf8] sm:$0xff]
      %v243 = vadd.f32 %v211, %v212
      %244 = vadd.xlane.f32.xlu0 %v243
      %v245 = vpop.xlane.xlu0 %244
      %v246 = vadd.f32 %v213, %v214
      %247 = vadd.xlane.f32.xlu0 %v246
      %v248 = vpop.xlane.xlu0 %247
      %v249 = vadd.f32 %v215, %v216
      %250 = vadd.xlane.f32.xlu0 %v249
      %v251 = vpop.xlane.xlu0 %250
      %v252 = vadd.f32 %v217, %v218
      %253 = vadd.xlane.f32.xlu0 %v252
      %v254 = vpop.xlane.xlu0 %253
      %v255 = vadd.f32 %v219, %v220
      %256 = vadd.xlane.f32.xlu0 %v255
      %v257 = vpop.xlane.xlu0 %256
      %v258 = vadd.f32 %v221, %v222
      %259 = vadd.xlane.f32.xlu0 %v258
      %v260 = vpop.xlane.xlu0 %259
      %v261 = vadd.f32 %v223, %v224
      %262 = vadd.xlane.f32.xlu0 %v261
      %v263 = vpop.xlane.xlu0 %262
      %v264 = vadd.f32 %v225, %v226
      %265 = vadd.xlane.f32.xlu0 %v264
      %v266 = vpop.xlane.xlu0 %265
      %v267 = vadd.f32 %v227, %v228
      %268 = vadd.xlane.f32.xlu0 %v267
      %v269 = vpop.xlane.xlu0 %268
      %v270 = vadd.f32 %v229, %v230
      %271 = vadd.xlane.f32.xlu0 %v270
      %v272 = vpop.xlane.xlu0 %271
      %v273 = vadd.f32 %v231, %v232
      %274 = vadd.xlane.f32.xlu0 %v273
      %v275 = vpop.xlane.xlu0 %274
      %v276 = vadd.f32 %v233, %v234
      %277 = vadd.xlane.f32.xlu0 %v276
      %v278 = vpop.xlane.xlu0 %277
      %v279 = vadd.f32 %v235, %v236
      %280 = vadd.xlane.f32.xlu0 %v279
      %v281 = vpop.xlane.xlu0 %280
      %v282 = vadd.f32 %v237, %v238
      %283 = vadd.xlane.f32.xlu0 %v282
      %v284 = vpop.xlane.xlu0 %283
      %v285 = vadd.f32 %v239, %v240
      %286 = vadd.xlane.f32.xlu0 %v285
      %v287 = vpop.xlane.xlu0 %286
      %v288 = vadd.f32 %v241, %v242
      %289 = vadd.xlane.f32.xlu0 %v288
      %v290 = vpop.xlane.xlu0 %289
      %v291 = vmul.f32 %v245, 0.00390625
      %v292 = vmul.f32 %v248, 0.00390625
      %v293 = vmul.f32 %v251, 0.00390625
      %v294 = vmul.f32 %v254, 0.00390625
      %v295 = vmul.f32 %v257, 0.00390625
      %v296 = vmul.f32 %v260, 0.00390625
      %v297 = vmul.f32 %v263, 0.00390625
      %v298 = vmul.f32 %v266, 0.00390625
      %v299 = vmul.f32 %v269, 0.00390625
      %v300 = vmul.f32 %v272, 0.00390625
      %v301 = vmul.f32 %v275, 0.00390625
      %v302 = vmul.f32 %v278, 0.00390625
      %v303 = vmul.f32 %v281, 0.00390625
      %v304 = vmul.f32 %v284, 0.00390625
      %v305 = vmul.f32 %v287, 0.00390625
      %v306 = vmul.f32 %v290, 0.00390625
      %v307 = vld [vmem:[%s1] sm:$0xff]
      %v308 = vld [vmem:[%s1 + $0x8] sm:$0xff]
      %v309 = vld [vmem:[%s1 + $0x10] sm:$0xff]
      %v310 = vld [vmem:[%s1 + $0x18] sm:$0xff]
      %v311 = vld [vmem:[%s1 + $0x20] sm:$0xff]
      %v312 = vld [vmem:[%s1 + $0x28] sm:$0xff]
      %v313 = vld [vmem:[%s1 + $0x30] sm:$0xff]
      %v314 = vld [vmem:[%s1 + $0x38] sm:$0xff]
      %v315 = vld [vmem:[%s1 + $0x40] sm:$0xff]
      %v316 = vld [vmem:[%s1 + $0x48] sm:$0xff]
      %v317 = vld [vmem:[%s1 + $0x50] sm:$0xff]
      %v318 = vld [vmem:[%s1 + $0x58] sm:$0xff]
      %v319 = vld [vmem:[%s1 + $0x60] sm:$0xff]
      %v320 = vld [vmem:[%s1 + $0x68] sm:$0xff]
      %v321 = vld [vmem:[%s1 + $0x70] sm:$0xff]
      %v322 = vld [vmem:[%s1 + $0x78] sm:$0xff]
      %v323 = vmul.f32 %v307, %v291
      %v324 = vmul.f32 %v308, %v292
      %v325 = vmul.f32 %v309, %v293
      %v326 = vmul.f32 %v310, %v294
      %v327 = vmul.f32 %v311, %v295
      %v328 = vmul.f32 %v312, %v296
      %v329 = vmul.f32 %v313, %v297
      %v330 = vmul.f32 %v314, %v298
      %v331 = vmul.f32 %v315, %v299
      %v332 = vmul.f32 %v316, %v300
      %v333 = vmul.f32 %v317, %v301
      %v334 = vmul.f32 %v318, %v302
      %v335 = vmul.f32 %v319, %v303
      %v336 = vmul.f32 %v320, %v304
      %v337 = vmul.f32 %v321, %v305
      %v338 = vmul.f32 %v322, %v306
      %vm339 = vcmask 64512
      %v340 = vsel %vm339, %v323, 0.0
      %v341 = vsel %vm339, %v324, 0.0
      %v342 = vadd.f32 %v340, %v341
      %v343 = vsel %vm339, %v325, 0.0
      %v344 = vadd.f32 %v342, %v343
      %v345 = vsel %vm339, %v326, 0.0
      %v346 = vadd.f32 %v344, %v345
      %v347 = vsel %vm339, %v327, 0.0
      %v348 = vadd.f32 %v346, %v347
      %v349 = vsel %vm339, %v328, 0.0
      %v350 = vadd.f32 %v348, %v349
      %v351 = vsel %vm339, %v329, 0.0
      %v352 = vadd.f32 %v350, %v351
      %v353 = vsel %vm339, %v330, 0.0
      %v354 = vadd.f32 %v352, %v353
      %v355 = vsel %vm339, %v331, 0.0
      %v356 = vadd.f32 %v354, %v355
      %v357 = vsel %vm339, %v332, 0.0
      %v358 = vadd.f32 %v356, %v357
      %v359 = vsel %vm339, %v333, 0.0
      %v360 = vadd.f32 %v358, %v359
      %v361 = vsel %vm339, %v334, 0.0
      %v362 = vadd.f32 %v360, %v361
      %v363 = vsel %vm339, %v335, 0.0
      %v364 = vadd.f32 %v362, %v363
      %v365 = vsel %vm339, %v336, 0.0
      %v366 = vadd.f32 %v364, %v365
      %v367 = vsel %vm339, %v337, 0.0
      %v368 = vadd.f32 %v366, %v367
      %v369 = vsel %vm339, %v338, 0.0
      %v370 = vadd.f32 %v368, %v369
      %v371 = vrot.slane %v370, 4
      %v372 = vadd.f32 %v370, %v371
      %v373 = vrot.slane %v372, 2
      %v374 = vadd.f32 %v372, %v373
      %v375 = vrot.slane %v374, 1
      %v376 = vadd.f32 %v374, %v375
      %v377 = vmax.f32 %v376, 0.0
      %v378 = vld [vmem:[%s2] sm:$0xff]
      %v379 = vld [vmem:[%s2 + $0x8] sm:$0xff]
      %v380 = vld [vmem:[%s2 + $0x10] sm:$0xff]
      %v381 = vld [vmem:[%s2 + $0x18] sm:$0xff]
      %v382 = vld [vmem:[%s2 + $0x20] sm:$0xff]
      %v383 = vld [vmem:[%s2 + $0x28] sm:$0xff]
      %v384 = vld [vmem:[%s2 + $0x30] sm:$0xff]
      %v385 = vld [vmem:[%s2 + $0x38] sm:$0xff]
      %v386 = vld [vmem:[%s2 + $0x40] sm:$0xff]
      %v387 = vld [vmem:[%s2 + $0x48] sm:$0xff]
      %v388 = vld [vmem:[%s2 + $0x50] sm:$0xff]
      %v389 = vld [vmem:[%s2 + $0x58] sm:$0xff]
      %v390 = vld [vmem:[%s2 + $0x60] sm:$0xff]
      %v391 = vld [vmem:[%s2 + $0x68] sm:$0xff]
      %v392 = vld [vmem:[%s2 + $0x70] sm:$0xff]
      %v393 = vld [vmem:[%s2 + $0x78] sm:$0xff]
      %v394 = vmul.f32 %v378, %v377
      %v395 = vmul.f32 %v379, %v377
      %v396 = vmul.f32 %v380, %v377
      %v397 = vmul.f32 %v381, %v377
      %v398 = vmul.f32 %v382, %v377
      %v399 = vmul.f32 %v383, %v377
      %v400 = vmul.f32 %v384, %v377
      %v401 = vmul.f32 %v385, %v377
      %v402 = vmul.f32 %v386, %v377
      %v403 = vmul.f32 %v387, %v377
      %v404 = vmul.f32 %v388, %v377
      %v405 = vmul.f32 %v389, %v377
      %v406 = vmul.f32 %v390, %v377
      %v407 = vmul.f32 %v391, %v377
      %v408 = vmul.f32 %v392, %v377
      %v409 = vmul.f32 %v393, %v377
      %v410 = vsel %vm339, %v394, 0.0
      %411 = vadd.xlane.f32.xlu0 %v410
      %v412 = vpop.xlane.xlu0 %411
      %v413 = vsel %vm339, %v395, 0.0
      %414 = vadd.xlane.f32.xlu0 %v413
      %v415 = vpop.xlane.xlu0 %414
      %v416 = vsel %vm339, %v396, 0.0
      %417 = vadd.xlane.f32.xlu0 %v416
      %v418 = vpop.xlane.xlu0 %417
      %v419 = vsel %vm339, %v397, 0.0
      %420 = vadd.xlane.f32.xlu0 %v419
      %v421 = vpop.xlane.xlu0 %420
      %v422 = vsel %vm339, %v398, 0.0
      %423 = vadd.xlane.f32.xlu0 %v422
      %v424 = vpop.xlane.xlu0 %423
      %v425 = vsel %vm339, %v399, 0.0
      %426 = vadd.xlane.f32.xlu0 %v425
      %v427 = vpop.xlane.xlu0 %426
      %v428 = vsel %vm339, %v400, 0.0
      %429 = vadd.xlane.f32.xlu0 %v428
      %v430 = vpop.xlane.xlu0 %429
      %v431 = vsel %vm339, %v401, 0.0
      %432 = vadd.xlane.f32.xlu0 %v431
      %v433 = vpop.xlane.xlu0 %432
      %v434 = vsel %vm339, %v402, 0.0
      %435 = vadd.xlane.f32.xlu0 %v434
      %v436 = vpop.xlane.xlu0 %435
      %v437 = vsel %vm339, %v403, 0.0
      %438 = vadd.xlane.f32.xlu0 %v437
      %v439 = vpop.xlane.xlu0 %438
      %v440 = vsel %vm339, %v404, 0.0
      %441 = vadd.xlane.f32.xlu0 %v440
      %v442 = vpop.xlane.xlu0 %441
      %v443 = vsel %vm339, %v405, 0.0
      %444 = vadd.xlane.f32.xlu0 %v443
      %v445 = vpop.xlane.xlu0 %444
      %v446 = vsel %vm339, %v406, 0.0
      %447 = vadd.xlane.f32.xlu0 %v446
      %v448 = vpop.xlane.xlu0 %447
      %v449 = vsel %vm339, %v407, 0.0
      %450 = vadd.xlane.f32.xlu0 %v449
      %v451 = vpop.xlane.xlu0 %450
      %v452 = vsel %vm339, %v408, 0.0
      %453 = vadd.xlane.f32.xlu0 %v452
      %v454 = vpop.xlane.xlu0 %453
      %v455 = vsel %vm339, %v409, 0.0
      %456 = vadd.xlane.f32.xlu0 %v455
      %v457 = vpop.xlane.xlu0 %456
      %v458 = vsub.f32 0.0, %v412
      %v459 = vsub.f32 0.0, %v415
      %v460 = vsub.f32 0.0, %v418
      %v461 = vsub.f32 0.0, %v421
      %v462 = vsub.f32 0.0, %v424
      %v463 = vsub.f32 0.0, %v427
      %v464 = vsub.f32 0.0, %v430
      %v465 = vsub.f32 0.0, %v433
      %v466 = vsub.f32 0.0, %v436
      %v467 = vsub.f32 0.0, %v439
      %v468 = vsub.f32 0.0, %v442
      %v469 = vsub.f32 0.0, %v445
      %v470 = vsub.f32 0.0, %v448
      %v471 = vsub.f32 0.0, %v451
      %v472 = vsub.f32 0.0, %v454
      %v473 = vsub.f32 0.0, %v457
      %v474 = vmul.f32 %v458, 1.442695
      %v475 = vpow.pop %v474
      %v476 = vmul.f32 %v459, 1.442695
      %v477 = vpow.pop %v476
      %v478 = vmul.f32 %v460, 1.442695
      %v479 = vpow.pop %v478
      %v480 = vmul.f32 %v461, 1.442695
      %v481 = vpow.pop %v480
      %v482 = vmul.f32 %v462, 1.442695
      %v483 = vpow.pop %v482
      %v484 = vmul.f32 %v463, 1.442695
      %v485 = vpow.pop %v484
      %v486 = vmul.f32 %v464, 1.442695
      %v487 = vpow.pop %v486
      %v488 = vmul.f32 %v465, 1.442695
      %v489 = vpow.pop %v488
      %v490 = vmul.f32 %v466, 1.442695
      %v491 = vpow.pop %v490
      %v492 = vmul.f32 %v467, 1.442695
      %v493 = vpow.pop %v492
      %v494 = vmul.f32 %v468, 1.442695
      %v495 = vpow.pop %v494
      %v496 = vmul.f32 %v469, 1.442695
      %v497 = vpow.pop %v496
      %v498 = vmul.f32 %v470, 1.442695
      %v499 = vpow.pop %v498
      %v500 = vmul.f32 %v471, 1.442695
      %v501 = vpow.pop %v500
      %v502 = vmul.f32 %v472, 1.442695
      %v503 = vpow.pop %v502
      %v504 = vmul.f32 %v473, 1.442695
      %v505 = vpow.pop %v504
      %v506 = vadd.f32 %v475, 1.0
      %v507 = vadd.f32 %v477, 1.0
      %v508 = vadd.f32 %v479, 1.0
      %v509 = vadd.f32 %v481, 1.0
      %v510 = vadd.f32 %v483, 1.0
      %v511 = vadd.f32 %v485, 1.0
      %v512 = vadd.f32 %v487, 1.0
      %v513 = vadd.f32 %v489, 1.0
      %v514 = vadd.f32 %v491, 1.0
      %v515 = vadd.f32 %v493, 1.0
      %v516 = vadd.f32 %v495, 1.0
      %v517 = vadd.f32 %v497, 1.0
      %v518 = vadd.f32 %v499, 1.0
      %v519 = vadd.f32 %v501, 1.0
      %v520 = vadd.f32 %v503, 1.0
      %v521 = vadd.f32 %v505, 1.0
      %v522 = vrcp.pop %v506
      %v523 = vmul.f32 1.0, %v522
      %v524 = vrcp.pop %v507
      %v525 = vmul.f32 1.0, %v524
      %v526 = vrcp.pop %v508
      %v527 = vmul.f32 1.0, %v526
      %v528 = vrcp.pop %v509
      %v529 = vmul.f32 1.0, %v528
      %v530 = vrcp.pop %v510
      %v531 = vmul.f32 1.0, %v530
      %v532 = vrcp.pop %v511
      %v533 = vmul.f32 1.0, %v532
      %v534 = vrcp.pop %v512
      %v535 = vmul.f32 1.0, %v534
      %v536 = vrcp.pop %v513
      %v537 = vmul.f32 1.0, %v536
      %v538 = vrcp.pop %v514
      %v539 = vmul.f32 1.0, %v538
      %v540 = vrcp.pop %v515
      %v541 = vmul.f32 1.0, %v540
      %v542 = vrcp.pop %v516
      %v543 = vmul.f32 1.0, %v542
      %v544 = vrcp.pop %v517
      %v545 = vmul.f32 1.0, %v544
      %v546 = vrcp.pop %v518
      %v547 = vmul.f32 1.0, %v546
      %v548 = vrcp.pop %v519
      %v549 = vmul.f32 1.0, %v548
      %v550 = vrcp.pop %v520
      %v551 = vmul.f32 1.0, %v550
      %v552 = vrcp.pop %v521
      %v553 = vmul.f32 1.0, %v552
      %vm554 = vcmask 7168
      %555 = vst.msk [vmem:[%s205] sm:$0xff] %vm554, %v523
      %556 = vst.msk [vmem:[%s205 + $0x8] sm:$0xff] %vm554, %v525
      %557 = vst.msk [vmem:[%s205 + $0x10] sm:$0xff] %vm554, %v527
      %558 = vst.msk [vmem:[%s205 + $0x18] sm:$0xff] %vm554, %v529
      %559 = vst.msk [vmem:[%s205 + $0x20] sm:$0xff] %vm554, %v531
      %560 = vst.msk [vmem:[%s205 + $0x28] sm:$0xff] %vm554, %v533
      %561 = vst.msk [vmem:[%s205 + $0x30] sm:$0xff] %vm554, %v535
      %562 = vst.msk [vmem:[%s205 + $0x38] sm:$0xff] %vm554, %v537
      %563 = vst.msk [vmem:[%s205 + $0x40] sm:$0xff] %vm554, %v539
      %564 = vst.msk [vmem:[%s205 + $0x48] sm:$0xff] %vm554, %v541
      %565 = vst.msk [vmem:[%s205 + $0x50] sm:$0xff] %vm554, %v543
      %566 = vst.msk [vmem:[%s205 + $0x58] sm:$0xff] %vm554, %v545
      %567 = vst.msk [vmem:[%s205 + $0x60] sm:$0xff] %vm554, %v547
      %568 = vst.msk [vmem:[%s205 + $0x68] sm:$0xff] %vm554, %v549
      %569 = vst.msk [vmem:[%s205 + $0x70] sm:$0xff] %vm554, %v551
      %570 = vst.msk [vmem:[%s205 + $0x78] sm:$0xff] %vm554, %v553
      %v571 = vmul.f32 %v211, %v523
      %v572 = vmul.f32 %v212, %v523
      %v573 = vmul.f32 %v213, %v525
      %v574 = vmul.f32 %v214, %v525
      %v575 = vmul.f32 %v215, %v527
      %v576 = vmul.f32 %v216, %v527
      %v577 = vmul.f32 %v217, %v529
      %v578 = vmul.f32 %v218, %v529
      %v579 = vmul.f32 %v219, %v531
      %v580 = vmul.f32 %v220, %v531
      %v581 = vmul.f32 %v221, %v533
      %v582 = vmul.f32 %v222, %v533
      %v583 = vmul.f32 %v223, %v535
      %v584 = vmul.f32 %v224, %v535
      %v585 = vmul.f32 %v225, %v537
      %v586 = vmul.f32 %v226, %v537
      %v587 = vmul.f32 %v227, %v539
      %v588 = vmul.f32 %v228, %v539
      %v589 = vmul.f32 %v229, %v541
      %v590 = vmul.f32 %v230, %v541
      %v591 = vmul.f32 %v231, %v543
      %v592 = vmul.f32 %v232, %v543
      %v593 = vmul.f32 %v233, %v545
      %v594 = vmul.f32 %v234, %v545
      %v595 = vmul.f32 %v235, %v547
      %v596 = vmul.f32 %v236, %v547
      %v597 = vmul.f32 %v237, %v549
      %v598 = vmul.f32 %v238, %v549
      %v599 = vmul.f32 %v239, %v551
      %v600 = vmul.f32 %v240, %v551
      %v601 = vmul.f32 %v241, %v553
      %v602 = vmul.f32 %v242, %v553
      %v603 = vadd.f32 %v571, %v573
      %v604 = vadd.f32 %v603, %v575
      %v605 = vadd.f32 %v604, %v577
      %v606 = vadd.f32 %v605, %v579
      %v607 = vadd.f32 %v606, %v581
      %v608 = vadd.f32 %v607, %v583
      %v609 = vadd.f32 %v608, %v585
      %v610 = vadd.f32 %v609, %v587
      %v611 = vadd.f32 %v610, %v589
      %v612 = vadd.f32 %v611, %v591
      %v613 = vadd.f32 %v612, %v593
      %v614 = vadd.f32 %v613, %v595
      %v615 = vadd.f32 %v614, %v597
      %v616 = vadd.f32 %v615, %v599
      %v617 = vadd.f32 %v616, %v601
      %v618 = vrot.slane %v617, 4
      %v619 = vadd.f32 %v617, %v618
      %v620 = vrot.slane %v619, 2
      %v621 = vadd.f32 %v619, %v620
      %v622 = vrot.slane %v621, 1
      %v623 = vadd.f32 %v621, %v622
      %v624 = vadd.f32 %v572, %v574
      %v625 = vadd.f32 %v624, %v576
      %v626 = vadd.f32 %v625, %v578
      %v627 = vadd.f32 %v626, %v580
      %v628 = vadd.f32 %v627, %v582
      %v629 = vadd.f32 %v628, %v584
      %v630 = vadd.f32 %v629, %v586
      %v631 = vadd.f32 %v630, %v588
      %v632 = vadd.f32 %v631, %v590
      %v633 = vadd.f32 %v632, %v592
      %v634 = vadd.f32 %v633, %v594
      %v635 = vadd.f32 %v634, %v596
      %v636 = vadd.f32 %v635, %v598
      %v637 = vadd.f32 %v636, %v600
      %v638 = vadd.f32 %v637, %v602
      %v639 = vrot.slane %v638, 4
      %v640 = vadd.f32 %v638, %v639
      %v641 = vrot.slane %v640, 2
      %v642 = vadd.f32 %v640, %v641
      %v643 = vrot.slane %v642, 1
      %v644 = vadd.f32 %v642, %v643
      %v645 = vmul.f32 %v623, 0.0078125
      %v646 = vmul.f32 %v644, 0.0078125
      %v649 = vcombine.low %v645, %v646
      %v651 = vunpack.c.l.s4 1966171168
      %v652 = vunpack.c.0.s8 %v651
      %v653 = vlaneseq
      %v654 = vshrl.u32 %v653, 7
      %v655 = vsub.s32 %v652, %v654
      %v656 = vrot.slane %v649, %v655
      %v658 = vunpack.c.l.s4 1966171168
      %v659 = vunpack.c.0.s8 %v658
      %v660 = vlaneseq
      %v661 = vshrl.u32 %v660, 7
      %v662 = vsub.s32 %v659, %v661
      %v663 = vrot.slane %v656, %v662
      %v665 = vlaneseq
      %vm666 = vcmp.ge.s32.totalorder %v665, 0
      %vm667 = vcmp.lt.s32.totalorder %v665, 256
      %vm668 = vmand %vm666, %vm667
      %669 = vst.msk [vmem:[%s210] ss:$2 sm:$0x3] %vm668, %v663
      %v670 = vmax.f32 %v571, %v575
      %v671 = vmax.f32 %v573, %v577
      %v672 = vmax.f32 %v670, %v579
      %v673 = vmax.f32 %v671, %v581
      %v674 = vmax.f32 %v672, %v583
      %v675 = vmax.f32 %v673, %v585
      %v676 = vmax.f32 %v674, %v587
      %v677 = vmax.f32 %v675, %v589
      %v678 = vmax.f32 %v676, %v591
      %v679 = vmax.f32 %v677, %v593
      %v680 = vmax.f32 %v678, %v595
      %v681 = vmax.f32 %v679, %v597
      %v682 = vmax.f32 %v680, %v599
      %v683 = vmax.f32 %v681, %v601
      %v684 = vmax.f32 %v682, %v683
      %v685 = vrot.slane %v684, 4
      %v686 = vmax.f32 %v684, %v685
      %v687 = vrot.slane %v686, 2
      %v688 = vmax.f32 %v686, %v687
      %v689 = vrot.slane %v688, 1
      %v690 = vmax.f32 %v688, %v689
      %v691 = vmax.f32 %v572, %v576
      %v692 = vmax.f32 %v574, %v578
      %v693 = vmax.f32 %v691, %v580
      %v694 = vmax.f32 %v692, %v582
      %v695 = vmax.f32 %v693, %v584
      %v696 = vmax.f32 %v694, %v586
      %v697 = vmax.f32 %v695, %v588
      %v698 = vmax.f32 %v696, %v590
      %v699 = vmax.f32 %v697, %v592
      %v700 = vmax.f32 %v698, %v594
      %v701 = vmax.f32 %v699, %v596
      %v702 = vmax.f32 %v700, %v598
      %v703 = vmax.f32 %v701, %v600
      %v704 = vmax.f32 %v702, %v602
      %v705 = vmax.f32 %v703, %v704
      %v706 = vrot.slane %v705, 4
      %v707 = vmax.f32 %v705, %v706
      %v708 = vrot.slane %v707, 2
      %v709 = vmax.f32 %v707, %v708
      %v710 = vrot.slane %v709, 1
      %v711 = vmax.f32 %v709, %v710
      %v714 = vcombine.low %v690, %v711
      %v716 = vunpack.c.l.s4 1966171168
      %v717 = vunpack.c.0.s8 %v716
      %v718 = vlaneseq
      %v719 = vshrl.u32 %v718, 7
      %v720 = vsub.s32 %v717, %v719
      %v721 = vrot.slane %v714, %v720
      %v723 = vunpack.c.l.s4 1966171168
      %v724 = vunpack.c.0.s8 %v723
      %v725 = vlaneseq
      %v726 = vshrl.u32 %v725, 7
      %v727 = vsub.s32 %v724, %v726
      %v728 = vrot.slane %v721, %v727
      %s730 = scalar_lea.vmem %s210, 1
      %731 = vst.msk [vmem:[%s730] ss:$2 sm:$0x3] %vm668, %v728
      %p732 = scmp.lt.s32.totalorder %s16, 1
      %s733 = scalar_select %p732, %s16, 1
      %s734 = smul.addr %s733, 16
      %s735 = smul.addr %s734, 8
      %s736 = scalar_lea.vmem %s3, %s735
      %p737 = scmp.lt.s32.totalorder %s16, 1
      %s738 = scalar_select %p737, %s16, 1
      %s739 = smul.addr %s738, 2
      %s740 = smul.addr %s739, 2
      %s741 = scalar_lea.vmem %s4, %s740
      // Predicated region
      $region33: #{cbam_forward.2} parent=31 // pred_check
        %p742 = pneg %p102
      $region34: #{cbam_forward.2} parent=31 // pred_check_branch
        %744 = sbr.rel (%p742) target = $region36
      $region35: #{cbam_forward.2} parent=31 // pred_region
        _
      $region36: #{cbam_forward.2} parent=31 // pred_fallthru
        _
      // Predicated region
      $region37: #{cbam_forward.2} parent=31 // pred_check
        %p745 = pneg %p128
      $region38: #{cbam_forward.2} parent=31 // pred_check_branch
        %747 = sbr.rel (%p745) target = $region40
      $region39: #{cbam_forward.2} parent=31 // pred_region
        _
      $region40: #{cbam_forward.2} parent=31 // pred_fallthru
        _
    $region32: #{cbam_forward.2} parent=5 // pred_fallthru
      _
    %p748 = scmp.le.s32.totalorder 2, %s11
    // Predicated region
    $region41: #{cbam_forward.2} parent=5 // pred_check
      %p749 = pneg %p748
    $region42: #{cbam_forward.2} parent=5 // pred_check_branch
      %751 = sbr.rel (%p749) target = $region44
    $region43: #{cbam_forward.2} parent=5 // pred_region
      %s752 = ssub.s32 %s11, 2
      // Predicated region
      $region45: #{cbam_forward.2} parent=43 // pred_check
        %p753 = pneg %p108
      $region46: #{cbam_forward.2} parent=43 // pred_check_branch
        %755 = sbr.rel (%p753) target = $region48
      $region47: #{cbam_forward.2} parent=43 // pred_region
        %p756 = scmp.lt.s32.totalorder %s17, 1
        %s757 = scalar_select %p756, %s17, 1
        %s758 = smul.addr %s757, 16
        %s759 = smul.addr %s758, 8
        %s760 = scalar_lea.vmem %s3, %s759
      $region48: #{cbam_forward.2} parent=43 // pred_fallthru
        _
      // Predicated region
      $region49: #{cbam_forward.2} parent=43 // pred_check
        %p761 = pneg %p134
      $region50: #{cbam_forward.2} parent=43 // pred_check_branch
        %763 = sbr.rel (%p761) target = $region52
      $region51: #{cbam_forward.2} parent=43 // pred_region
        %p764 = scmp.lt.s32.totalorder %s17, 1
        %s765 = scalar_select %p764, %s17, 1
        %s766 = smul.addr %s765, 2
        %s767 = smul.addr %s766, 2
        %s768 = scalar_lea.vmem %s4, %s767
      $region52: #{cbam_forward.2} parent=43 // pred_fallthru
        _
    $region44: #{cbam_forward.2} parent=5 // pred_fallthru
      _
  $region6: #{cbam_forward.2} parent=0 // loop_footer
    %s15 = sadd.s32 1, %s11
  $region7: #{cbam_forward.2} parent=0 // loop_footer_branch
    %10 = sbr.rel target = $region3
  $region8: #{cbam_forward.2} parent=0 // loop_exit
    _

</llo_original>
